<compile_context>
chip_gen: v7x
topology: tpu7x:2x2x1
jax: 0.10.0
libtpu: 0.0.40
codegen_flags: <defaults>
</compile_context>

<pallas_src>
import math
import functools

import jax
import jax.numpy as jnp
from jax.experimental import pallas as pl
from jax.experimental.pallas import tpu as pltpu


# ------------------------------------------------------------------ helpers

def _layernorm(v, g, b, eps=1e-5):
    # torch.nn.LayerNorm: biased variance over last dim, eps=1e-5
    mu = jnp.mean(v, axis=-1, keepdims=True)
    var = jnp.mean((v - mu) ** 2, axis=-1, keepdims=True)
    return (v - mu) * jax.lax.rsqrt(var + eps) * g + b


_LAYER_W = ("g1", "b1", "wq", "bq", "wk", "bk", "wv", "bv",
            "wo", "bo", "g2", "b2", "w1", "c1", "w2", "c2")


# ------------------------------------------------------------ fused encoder kernel

def _encoder_kernel(x_ref, pe_ref,
                    g1_ref, b1_ref,
                    wq_ref, bq_ref, wk_ref, bk_ref, wv_ref, bv_ref,
                    wo_ref, bo_ref,
                    g2_ref, b2_ref,
                    w1_ref, c1_ref, w2_ref, c2_ref,
                    gf_ref, bf_ref,
                    o_ref,
                    act_ref,
                    *, num_heads, embed_scale):
    l = pl.program_id(1)
    n_layers = pl.num_programs(1)

    # ---- first layer step: positional encoding  x*sqrt(E) + pe  (dropout = id)
    @pl.when(l == 0)
    def _():
        act_ref[...] = x_ref[...].astype(jnp.float32) * embed_scale + pe_ref[...]

    x = act_ref[...]                               # [S, E] f32, resident in VMEM
    S, E = x.shape
    H = num_heads
    Dh = E // H

    # ---- pre-norm 1 + multi-head self-attention --------------------------
    x2 = _layernorm(x, g1_ref[0], b1_ref[0]).astype(jnp.bfloat16)
    # 1/sqrt(Dh) scale is pre-folded into wq / bq by the wrapper.
    q = jnp.dot(x2, wq_ref[...], preferred_element_type=jnp.float32) + bq_ref[0]
    k = jnp.dot(x2, wk_ref[...], preferred_element_type=jnp.float32) + bk_ref[0]
    v = jnp.dot(x2, wv_ref[...], preferred_element_type=jnp.float32) + bv_ref[0]

    # batched heads: [S, E] -> [H, S, Dh]
    qh = q.reshape(S, H, Dh).transpose(1, 0, 2).astype(jnp.bfloat16)
    kh = k.reshape(S, H, Dh).transpose(1, 0, 2).astype(jnp.bfloat16)
    vh = v.reshape(S, H, Dh).transpose(1, 0, 2).astype(jnp.bfloat16)

    s = jnp.einsum('hqd,hkd->hqk', qh, kh,
                   preferred_element_type=jnp.float32)              # [H, S, S]
    s = s - jnp.max(s, axis=-1, keepdims=True)
    p = jnp.exp(s)
    p = p * pl.reciprocal(jnp.sum(p, axis=-1, keepdims=True), approx=True)
    ctx = jnp.einsum('hqk,hkd->hqd', p.astype(jnp.bfloat16), vh,
                     preferred_element_type=jnp.float32)            # [H, S, Dh]
    attn = ctx.transpose(1, 0, 2).reshape(S, E).astype(jnp.bfloat16)
    attn = jnp.dot(attn, wo_ref[...], preferred_element_type=jnp.float32) + bo_ref[0]
    x = x + attn

    # ---- pre-norm 2 + feed-forward ----------------------------------------
    x2 = _layernorm(x, g2_ref[0], b2_ref[0]).astype(jnp.bfloat16)
    h1 = jnp.dot(x2, w1_ref[...], preferred_element_type=jnp.float32) + c1_ref[0]
    h1 = jnp.maximum(h1, 0.0).astype(jnp.bfloat16)
    ff = jnp.dot(h1, w2_ref[...], preferred_element_type=jnp.float32) + c2_ref[0]
    x = x + ff

    act_ref[...] = x

    # ---- final LayerNorm + single write after the last layer ---------------
    @pl.when(l == n_layers - 1)
    def _():
        o_ref[...] = _layernorm(x, gf_ref[0], bf_ref[0]).astype(o_ref.dtype)


# ------------------------------------------------------------ wrapper

def encoder_forward(source, pe_table, stacked, final_g, final_b, num_heads):
    B, S, E = source.shape
    L = stacked["wq"].shape[0]
    pe = pe_table[:S]
    flat = [stacked[name] for name in _LAYER_W]

    def per_layer_spec(a):
        nd = a.ndim
        return pl.BlockSpec((None,) + a.shape[1:],
                            lambda b, l, _nd=nd: (l,) + (0,) * (_nd - 1))

    def shared_spec(a):
        nd = a.ndim
        return pl.BlockSpec(a.shape, lambda b, l, _nd=nd: (0,) * _nd)

    in_specs = [pl.BlockSpec((None, S, E), lambda b, l: (b, 0, 0)),   # source
                shared_spec(pe)]
    in_specs += [per_layer_spec(a) for a in flat]
    in_specs += [shared_spec(final_g), shared_spec(final_b)]

    return pl.pallas_call(
        functools.partial(_encoder_kernel, num_heads=num_heads,
                          embed_scale=math.sqrt(E)),
        out_shape=jax.ShapeDtypeStruct((B, S, E), source.dtype),
        grid=(B, L),
        in_specs=in_specs,
        out_specs=pl.BlockSpec((None, S, E), lambda b, l: (b, 0, 0)),
        scratch_shapes=[pltpu.VMEM((S, E), jnp.float32)],
        compiler_params=pltpu.CompilerParams(
            dimension_semantics=("parallel", "arbitrary")),
    )(source, pe, *flat, final_g, final_b)


# ------------------------------------------------------------ params / pe table

def build_pe(max_seq_len, E):
    # Reproduces the PyTorch PositionalEncoder formula exactly:
    #   pe[pos, i]   = sin(pos / 10000 ** (2*i/E))
    #   pe[pos, i+1] = cos(pos / 10000 ** ((2*i+1)/E))   for even i
    pos = jnp.arange(max_seq_len, dtype=jnp.float32)[:, None]
    i = jnp.arange(0, E, 2, dtype=jnp.float32)[None, :]
    pe = jnp.zeros((max_seq_len, E), jnp.float32)
    pe = pe.at[:, 0::2].set(jnp.sin(pos / 10000.0 ** (2.0 * i / E)))
    pe = pe.at[:, 1::2].set(jnp.cos(pos / 10000.0 ** ((2.0 * i + 1.0) / E)))
    return pe


def init_stacked_params(key, num_layers, E, ff_dim, num_heads):
    def one_layer(k):
        ks = jax.random.split(k, 12)
        s = 0.05
        n = lambda kk, shape: jax.random.normal(kk, shape, jnp.float32) * s
        return dict(
            g1=jnp.ones((1, E), jnp.float32), b1=jnp.zeros((1, E), jnp.float32),
            wq=n(ks[0], (E, E)), bq=n(ks[1], (1, E)),
            wk=n(ks[2], (E, E)), bk=n(ks[3], (1, E)),
            wv=n(ks[4], (E, E)), bv=n(ks[5], (1, E)),
            wo=n(ks[6], (E, E)), bo=n(ks[7], (1, E)),
            g2=jnp.ones((1, E), jnp.float32), b2=jnp.zeros((1, E), jnp.float32),
            w1=n(ks[8], (E, ff_dim)), c1=n(ks[9], (1, ff_dim)),
            w2=n(ks[10], (ff_dim, E)), c2=n(ks[11], (1, E)),
        )

    layer_keys = jax.random.split(key, num_layers)
    layers = [one_layer(k) for k in layer_keys]
    stacked = {name: jnp.stack([lp[name] for lp in layers]) for name in _LAYER_W}

    # Fold the attention 1/sqrt(Dh) scale into the query projection (weight + bias).
    scale = 1.0 / math.sqrt(E // num_heads)
    stacked["wq"] = stacked["wq"] * scale
    stacked["bq"] = stacked["bq"] * scale

    # MXU operands in bf16 (accumulation stays f32 inside the kernel).
    for name in ("wq", "wk", "wv", "wo", "w1", "w2"):
        stacked[name] = stacked[name].astype(jnp.bfloat16)
    return stacked


# ------------------------------------------------------------ main

if __name__ == "__main__":
    B, S, E = 2, 8, 32          # batch, seq, embedding_dim
    H, L = 4, 2                 # num_heads, num_layers
    MAX_SEQ = 16
    FF = 256                    # hard-coded ff_dim in Encoder.__init__

    key = jax.random.PRNGKey(0)
    kx, kp = jax.random.split(key)
    source = jax.random.normal(kx, (B, S, E), jnp.float32)

    stacked = init_stacked_params(kp, L, E, FF, H)
    final_g = jnp.ones((1, E), jnp.float32)
    final_b = jnp.zeros((1, E), jnp.float32)
    pe_table = build_pe(MAX_SEQ, E)

    out = encoder_forward(source, pe_table, stacked, final_g, final_b, H)
    jax.block_until_ready(out)
    assert out.shape == (B, S, E)
    print("KERNEL_OK")
</pallas_src>

<mosaic_0001>
module attributes {stable_mosaic.version = 11 : i64} {
  func.func @_encoder_kernel(%arg0: i32, %arg1: i32, %arg2: memref<1x8x32xf32, #tpu.memory_space<vmem>>, %arg3: memref<8x32xf32, #tpu.memory_space<vmem>>, %arg4: memref<1x1x32xf32, #tpu.memory_space<vmem>>, %arg5: memref<1x1x32xf32, #tpu.memory_space<vmem>>, %arg6: memref<1x32x32xbf16, #tpu.memory_space<vmem>>, %arg7: memref<1x1x32xf32, #tpu.memory_space<vmem>>, %arg8: memref<1x32x32xbf16, #tpu.memory_space<vmem>>, %arg9: memref<1x1x32xf32, #tpu.memory_space<vmem>>, %arg10: memref<1x32x32xbf16, #tpu.memory_space<vmem>>, %arg11: memref<1x1x32xf32, #tpu.memory_space<vmem>>, %arg12: memref<1x32x32xbf16, #tpu.memory_space<vmem>>, %arg13: memref<1x1x32xf32, #tpu.memory_space<vmem>>, %arg14: memref<1x1x32xf32, #tpu.memory_space<vmem>>, %arg15: memref<1x1x32xf32, #tpu.memory_space<vmem>>, %arg16: memref<1x32x256xbf16, #tpu.memory_space<vmem>>, %arg17: memref<1x1x256xf32, #tpu.memory_space<vmem>>, %arg18: memref<1x256x32xbf16, #tpu.memory_space<vmem>>, %arg19: memref<1x1x32xf32, #tpu.memory_space<vmem>>, %arg20: memref<1x32xf32, #tpu.memory_space<vmem>>, %arg21: memref<1x32xf32, #tpu.memory_space<vmem>>, %arg22: memref<1x8x32xf32, #tpu.memory_space<vmem>>, %arg23: memref<8x32xf32, #tpu.memory_space<vmem>>) attributes {dimension_semantics = [#tpu.dimension_semantics<parallel>, #tpu.dimension_semantics<arbitrary>], iteration_bounds = array<i64: 2, 2>, scalar_prefetch = 0 : i64, scratch_operands = 1 : i64, tpu.core_type = #tpu.core_type<tc>, window_params = [{transform_indices = @transform_0, window_bounds = array<i64: 1, 8, 32>}, {pipeline_mode = #tpu.pipeline_mode<synchronous>, transform_indices = @transform_1, window_bounds = array<i64: 8, 32>}, {transform_indices = @transform_2, window_bounds = array<i64: 1, 1, 32>}, {transform_indices = @transform_3, window_bounds = array<i64: 1, 1, 32>}, {transform_indices = @transform_4, window_bounds = array<i64: 1, 32, 32>}, {transform_indices = @transform_5, window_bounds = array<i64: 1, 1, 32>}, {transform_indices = @transform_6, window_bounds = array<i64: 1, 32, 32>}, {transform_indices = @transform_7, window_bounds = array<i64: 1, 1, 32>}, {transform_indices = @transform_8, window_bounds = array<i64: 1, 32, 32>}, {transform_indices = @transform_9, window_bounds = array<i64: 1, 1, 32>}, {transform_indices = @transform_10, window_bounds = array<i64: 1, 32, 32>}, {transform_indices = @transform_11, window_bounds = array<i64: 1, 1, 32>}, {transform_indices = @transform_12, window_bounds = array<i64: 1, 1, 32>}, {transform_indices = @transform_13, window_bounds = array<i64: 1, 1, 32>}, {transform_indices = @transform_14, window_bounds = array<i64: 1, 32, 256>}, {transform_indices = @transform_15, window_bounds = array<i64: 1, 1, 256>}, {transform_indices = @transform_16, window_bounds = array<i64: 1, 256, 32>}, {transform_indices = @transform_17, window_bounds = array<i64: 1, 1, 32>}, {pipeline_mode = #tpu.pipeline_mode<synchronous>, transform_indices = @transform_18, window_bounds = array<i64: 1, 32>}, {pipeline_mode = #tpu.pipeline_mode<synchronous>, transform_indices = @transform_19, window_bounds = array<i64: 1, 32>}, {transform_indices = @transform_20, window_bounds = array<i64: 1, 8, 32>}]} {
    %c0_i32 = arith.constant 0 : i32
    %0 = arith.cmpi eq, %arg1, %c0_i32 : i32
    %1 = arith.extui %0 : i1 to i32
    %c0_i32_0 = arith.constant 0 : i32
    %2 = arith.cmpi ne, %1, %c0_i32_0 : i32
    scf.if %2 {
      %c0_73 = arith.constant 0 : index
      %c0_74 = arith.constant 0 : index
      %c0_75 = arith.constant 0 : index
      %144 = vector.load %arg2[%c0_73, %c0_74, %c0_75] : memref<1x8x32xf32, #tpu.memory_space<vmem>>, vector<1x8x32xf32>
      %145 = vector.shape_cast %144 : vector<1x8x32xf32> to vector<8x32xf32>
      %cst_76 = arith.constant 5.65685415 : f32
      %146 = vector.broadcast %cst_76 : f32 to vector<8x32xf32>
      %147 = arith.mulf %145, %146 : vector<8x32xf32>
      %c0_77 = arith.constant 0 : index
      %c0_78 = arith.constant 0 : index
      %148 = vector.load %arg3[%c0_77, %c0_78] : memref<8x32xf32, #tpu.memory_space<vmem>>, vector<8x32xf32>
      %149 = arith.addf %147, %148 : vector<8x32xf32>
      %c0_79 = arith.constant 0 : index
      %c0_80 = arith.constant 0 : index
      %150 = vector.load %arg23[%c0_79, %c0_80] : memref<8x32xf32, #tpu.memory_space<vmem>>, vector<8x32xf32>
      tpu.vector_store %arg23[%c0_79, %c0_80], %149 {strides = array<i32>} : memref<8x32xf32, #tpu.memory_space<vmem>>, vector<8x32xf32>,
    } else {
    }
    %c0 = arith.constant 0 : index
    %c0_1 = arith.constant 0 : index
    %3 = vector.load %arg23[%c0, %c0_1] : memref<8x32xf32, #tpu.memory_space<vmem>>, vector<8x32xf32>
    %c0_2 = arith.constant 0 : index
    %c0_3 = arith.constant 0 : index
    %c0_4 = arith.constant 0 : index
    %4 = vector.load %arg4[%c0_2, %c0_3, %c0_4] : memref<1x1x32xf32, #tpu.memory_space<vmem>>, vector<1x1x32xf32>
    %5 = vector.shape_cast %4 : vector<1x1x32xf32> to vector<32xf32>
    %c0_5 = arith.constant 0 : index
    %c0_6 = arith.constant 0 : index
    %c0_7 = arith.constant 0 : index
    %6 = vector.load %arg5[%c0_5, %c0_6, %c0_7] : memref<1x1x32xf32, #tpu.memory_space<vmem>>, vector<1x1x32xf32>
    %7 = vector.shape_cast %6 : vector<1x1x32xf32> to vector<32xf32>
    %cst = arith.constant dense<0.000000e+00> : vector<8xf32>
    %8 = vector.multi_reduction <add>, %3, %cst [1] : vector<8x32xf32> to vector<8xf32>
    %9 = vector.shape_cast %8 : vector<8xf32> to vector<8x1xf32>
    %cst_8 = arith.constant 3.200000e+01 : f32
    %10 = vector.broadcast %cst_8 : f32 to vector<8x1xf32>
    %11 = arith.divf %9, %10 : vector<8x1xf32>
    %12 = vector.broadcast %11 : vector<8x1xf32> to vector<8x32xf32>
    %13 = arith.subf %3, %12 : vector<8x32xf32>
    %14 = arith.mulf %13, %13 : vector<8x32xf32>
    %cst_9 = arith.constant dense<0.000000e+00> : vector<8xf32>
    %15 = vector.multi_reduction <add>, %14, %cst_9 [1] : vector<8x32xf32> to vector<8xf32>
    %16 = vector.shape_cast %15 : vector<8xf32> to vector<8x1xf32>
    %cst_10 = arith.constant 3.200000e+01 : f32
    %17 = vector.broadcast %cst_10 : f32 to vector<8x1xf32>
    %18 = arith.divf %16, %17 : vector<8x1xf32>
    %19 = vector.broadcast %11 : vector<8x1xf32> to vector<8x32xf32>
    %20 = arith.subf %3, %19 : vector<8x32xf32>
    %cst_11 = arith.constant 9.99999974E-6 : f32
    %21 = vector.broadcast %cst_11 : f32 to vector<8x1xf32>
    %22 = arith.addf %18, %21 : vector<8x1xf32>
    %23 = math.rsqrt %22 : vector<8x1xf32>
    %24 = vector.broadcast %23 : vector<8x1xf32> to vector<8x32xf32>
    %25 = arith.mulf %20, %24 : vector<8x32xf32>
    %26 = vector.shape_cast %5 : vector<32xf32> to vector<1x32xf32>
    %27 = vector.broadcast %26 : vector<1x32xf32> to vector<8x32xf32>
    %28 = arith.mulf %25, %27 : vector<8x32xf32>
    %29 = vector.shape_cast %7 : vector<32xf32> to vector<1x32xf32>
    %30 = vector.broadcast %29 : vector<1x32xf32> to vector<8x32xf32>
    %31 = arith.addf %28, %30 : vector<8x32xf32>
    %32 = arith.truncf %31 : vector<8x32xf32> to vector<8x32xbf16>
    %c0_12 = arith.constant 0 : index
    %c0_13 = arith.constant 0 : index
    %c0_14 = arith.constant 0 : index
    %33 = vector.load %arg6[%c0_12, %c0_13, %c0_14] : memref<1x32x32xbf16, #tpu.memory_space<vmem>>, vector<1x32x32xbf16>
    %34 = vector.shape_cast %33 : vector<1x32x32xbf16> to vector<32x32xbf16>
    %cst_15 = arith.constant dense<0.000000e+00> : vector<8x32xf32>
    %35 = tpu.matmul %32, %34, %cst_15 {dimension_numbers = #tpu.dot_dimension_numbers<[1], [0], [0], [1], [0, 0, 1, 1], [], []>} : vector<8x32xbf16>, vector<32x32xbf16>, vector<8x32xf32> -> vector<8x32xf32>
    %c0_16 = arith.constant 0 : index
    %c0_17 = arith.constant 0 : index
    %c0_18 = arith.constant 0 : index
    %36 = vector.load %arg7[%c0_16, %c0_17, %c0_18] : memref<1x1x32xf32, #tpu.memory_space<vmem>>, vector<1x1x32xf32>
    %37 = vector.shape_cast %36 : vector<1x1x32xf32> to vector<32xf32>
    %38 = vector.shape_cast %37 : vector<32xf32> to vector<1x32xf32>
    %39 = vector.broadcast %38 : vector<1x32xf32> to vector<8x32xf32>
    %40 = arith.addf %35, %39 : vector<8x32xf32>
    %c0_19 = arith.constant 0 : index
    %c0_20 = arith.constant 0 : index
    %c0_21 = arith.constant 0 : index
    %41 = vector.load %arg8[%c0_19, %c0_20, %c0_21] : memref<1x32x32xbf16, #tpu.memory_space<vmem>>, vector<1x32x32xbf16>
    %42 = vector.shape_cast %41 : vector<1x32x32xbf16> to vector<32x32xbf16>
    %cst_22 = arith.constant dense<0.000000e+00> : vector<8x32xf32>
    %43 = tpu.matmul %32, %42, %cst_22 {dimension_numbers = #tpu.dot_dimension_numbers<[1], [0], [0], [1], [0, 0, 1, 1], [], []>} : vector<8x32xbf16>, vector<32x32xbf16>, vector<8x32xf32> -> vector<8x32xf32>
    %c0_23 = arith.constant 0 : index
    %c0_24 = arith.constant 0 : index
    %c0_25 = arith.constant 0 : index
    %44 = vector.load %arg9[%c0_23, %c0_24, %c0_25] : memref<1x1x32xf32, #tpu.memory_space<vmem>>, vector<1x1x32xf32>
    %45 = vector.shape_cast %44 : vector<1x1x32xf32> to vector<32xf32>
    %46 = vector.shape_cast %45 : vector<32xf32> to vector<1x32xf32>
    %47 = vector.broadcast %46 : vector<1x32xf32> to vector<8x32xf32>
    %48 = arith.addf %43, %47 : vector<8x32xf32>
    %c0_26 = arith.constant 0 : index
    %c0_27 = arith.constant 0 : index
    %c0_28 = arith.constant 0 : index
    %49 = vector.load %arg10[%c0_26, %c0_27, %c0_28] : memref<1x32x32xbf16, #tpu.memory_space<vmem>>, vector<1x32x32xbf16>
    %50 = vector.shape_cast %49 : vector<1x32x32xbf16> to vector<32x32xbf16>
    %cst_29 = arith.constant dense<0.000000e+00> : vector<8x32xf32>
    %51 = tpu.matmul %32, %50, %cst_29 {dimension_numbers = #tpu.dot_dimension_numbers<[1], [0], [0], [1], [0, 0, 1, 1], [], []>} : vector<8x32xbf16>, vector<32x32xbf16>, vector<8x32xf32> -> vector<8x32xf32>
    %c0_30 = arith.constant 0 : index
    %c0_31 = arith.constant 0 : index
    %c0_32 = arith.constant 0 : index
    %52 = vector.load %arg11[%c0_30, %c0_31, %c0_32] : memref<1x1x32xf32, #tpu.memory_space<vmem>>, vector<1x1x32xf32>
    %53 = vector.shape_cast %52 : vector<1x1x32xf32> to vector<32xf32>
    %54 = vector.shape_cast %53 : vector<32xf32> to vector<1x32xf32>
    %55 = vector.broadcast %54 : vector<1x32xf32> to vector<8x32xf32>
    %56 = arith.addf %51, %55 : vector<8x32xf32>
    %57 = vector.shape_cast %40 : vector<8x32xf32> to vector<8x4x8xf32>
    %58 = tpu.transpose %57, [1, 0, 2] : vector<8x4x8xf32> -> vector<4x8x8xf32>
    %59 = arith.truncf %58 : vector<4x8x8xf32> to vector<4x8x8xbf16>
    %60 = vector.shape_cast %48 : vector<8x32xf32> to vector<8x4x8xf32>
    %61 = tpu.transpose %60, [1, 0, 2] : vector<8x4x8xf32> -> vector<4x8x8xf32>
    %62 = arith.truncf %61 : vector<4x8x8xf32> to vector<4x8x8xbf16>
    %63 = vector.shape_cast %56 : vector<8x32xf32> to vector<8x4x8xf32>
    %64 = tpu.transpose %63, [1, 0, 2] : vector<8x4x8xf32> -> vector<4x8x8xf32>
    %65 = arith.truncf %64 : vector<4x8x8xf32> to vector<4x8x8xbf16>
    "tpu.trace_start"() <{level = 10 : i32, message = "hqd,hkd->hqk"}> : () -> ()
    %cst_33 = arith.constant dense<0.000000e+00> : vector<4x8x8xf32>
    %66 = tpu.matmul %59, %62, %cst_33 {dimension_numbers = #tpu.dot_dimension_numbers<[2], [2], [1], [1], [0, 0, 0, 1, 1, 1], [0], [0]>} : vector<4x8x8xbf16>, vector<4x8x8xbf16>, vector<4x8x8xf32> -> vector<4x8x8xf32>
    "tpu.trace_stop"() : () -> ()
    %cst_34 = arith.constant dense<0xFF800000> : vector<4x8xf32>
    %67 = vector.multi_reduction <maximumf>, %66, %cst_34 [2] : vector<4x8x8xf32> to vector<4x8xf32>
    %68 = vector.shape_cast %67 : vector<4x8xf32> to vector<4x8x1xf32>
    %69 = vector.broadcast %68 : vector<4x8x1xf32> to vector<4x8x8xf32>
    %70 = arith.subf %66, %69 : vector<4x8x8xf32>
    %71 = math.exp %70 : vector<4x8x8xf32>
    %cst_35 = arith.constant dense<0.000000e+00> : vector<4x8xf32>
    %72 = vector.multi_reduction <add>, %71, %cst_35 [2] : vector<4x8x8xf32> to vector<4x8xf32>
    %73 = vector.shape_cast %72 : vector<4x8xf32> to vector<4x8x1xf32>
    %74 = tpu.reciprocal %73 {approx = true} : vector<4x8x1xf32> -> vector<4x8x1xf32>
    %75 = vector.broadcast %74 : vector<4x8x1xf32> to vector<4x8x8xf32>
    %76 = arith.mulf %71, %75 : vector<4x8x8xf32>
    %77 = arith.truncf %76 : vector<4x8x8xf32> to vector<4x8x8xbf16>
    "tpu.trace_start"() <{level = 10 : i32, message = "hqk,hkd->hqd"}> : () -> ()
    %cst_36 = arith.constant dense<0.000000e+00> : vector<4x8x8xf32>
    %78 = tpu.matmul %77, %65, %cst_36 {dimension_numbers = #tpu.dot_dimension_numbers<[2], [1], [1], [2], [0, 0, 0, 1, 1, 2], [0], [0]>} : vector<4x8x8xbf16>, vector<4x8x8xbf16>, vector<4x8x8xf32> -> vector<4x8x8xf32>
    "tpu.trace_stop"() : () -> ()
    %79 = tpu.transpose %78, [1, 0, 2] : vector<4x8x8xf32> -> vector<8x4x8xf32>
    %80 = vector.shape_cast %79 : vector<8x4x8xf32> to vector<8x32xf32>
    %81 = arith.truncf %80 : vector<8x32xf32> to vector<8x32xbf16>
    %c0_37 = arith.constant 0 : index
    %c0_38 = arith.constant 0 : index
    %c0_39 = arith.constant 0 : index
    %82 = vector.load %arg12[%c0_37, %c0_38, %c0_39] : memref<1x32x32xbf16, #tpu.memory_space<vmem>>, vector<1x32x32xbf16>
    %83 = vector.shape_cast %82 : vector<1x32x32xbf16> to vector<32x32xbf16>
    %cst_40 = arith.constant dense<0.000000e+00> : vector<8x32xf32>
    %84 = tpu.matmul %81, %83, %cst_40 {dimension_numbers = #tpu.dot_dimension_numbers<[1], [0], [0], [1], [0, 0, 1, 1], [], []>} : vector<8x32xbf16>, vector<32x32xbf16>, vector<8x32xf32> -> vector<8x32xf32>
    %c0_41 = arith.constant 0 : index
    %c0_42 = arith.constant 0 : index
    %c0_43 = arith.constant 0 : index
    %85 = vector.load %arg13[%c0_41, %c0_42, %c0_43] : memref<1x1x32xf32, #tpu.memory_space<vmem>>, vector<1x1x32xf32>
    %86 = vector.shape_cast %85 : vector<1x1x32xf32> to vector<32xf32>
    %87 = vector.shape_cast %86 : vector<32xf32> to vector<1x32xf32>
    %88 = vector.broadcast %87 : vector<1x32xf32> to vector<8x32xf32>
    %89 = arith.addf %84, %88 : vector<8x32xf32>
    %90 = arith.addf %3, %89 : vector<8x32xf32>
    %c0_44 = arith.constant 0 : index
    %c0_45 = arith.constant 0 : index
    %c0_46 = arith.constant 0 : index
    %91 = vector.load %arg14[%c0_44, %c0_45, %c0_46] : memref<1x1x32xf32, #tpu.memory_space<vmem>>, vector<1x1x32xf32>
    %92 = vector.shape_cast %91 : vector<1x1x32xf32> to vector<32xf32>
    %c0_47 = arith.constant 0 : index
    %c0_48 = arith.constant 0 : index
    %c0_49 = arith.constant 0 : index
    %93 = vector.load %arg15[%c0_47, %c0_48, %c0_49] : memref<1x1x32xf32, #tpu.memory_space<vmem>>, vector<1x1x32xf32>
    %94 = vector.shape_cast %93 : vector<1x1x32xf32> to vector<32xf32>
    %cst_50 = arith.constant dense<0.000000e+00> : vector<8xf32>
    %95 = vector.multi_reduction <add>, %90, %cst_50 [1] : vector<8x32xf32> to vector<8xf32>
    %96 = vector.shape_cast %95 : vector<8xf32> to vector<8x1xf32>
    %cst_51 = arith.constant 3.200000e+01 : f32
    %97 = vector.broadcast %cst_51 : f32 to vector<8x1xf32>
    %98 = arith.divf %96, %97 : vector<8x1xf32>
    %99 = vector.broadcast %98 : vector<8x1xf32> to vector<8x32xf32>
    %100 = arith.subf %90, %99 : vector<8x32xf32>
    %101 = arith.mulf %100, %100 : vector<8x32xf32>
    %cst_52 = arith.constant dense<0.000000e+00> : vector<8xf32>
    %102 = vector.multi_reduction <add>, %101, %cst_52 [1] : vector<8x32xf32> to vector<8xf32>
    %103 = vector.shape_cast %102 : vector<8xf32> to vector<8x1xf32>
    %cst_53 = arith.constant 3.200000e+01 : f32
    %104 = vector.broadcast %cst_53 : f32 to vector<8x1xf32>
    %105 = arith.divf %103, %104 : vector<8x1xf32>
    %106 = vector.broadcast %98 : vector<8x1xf32> to vector<8x32xf32>
    %107 = arith.subf %90, %106 : vector<8x32xf32>
    %cst_54 = arith.constant 9.99999974E-6 : f32
    %108 = vector.broadcast %cst_54 : f32 to vector<8x1xf32>
    %109 = arith.addf %105, %108 : vector<8x1xf32>
    %110 = math.rsqrt %109 : vector<8x1xf32>
    %111 = vector.broadcast %110 : vector<8x1xf32> to vector<8x32xf32>
    %112 = arith.mulf %107, %111 : vector<8x32xf32>
    %113 = vector.shape_cast %92 : vector<32xf32> to vector<1x32xf32>
    %114 = vector.broadcast %113 : vector<1x32xf32> to vector<8x32xf32>
    %115 = arith.mulf %112, %114 : vector<8x32xf32>
    %116 = vector.shape_cast %94 : vector<32xf32> to vector<1x32xf32>
    %117 = vector.broadcast %116 : vector<1x32xf32> to vector<8x32xf32>
    %118 = arith.addf %115, %117 : vector<8x32xf32>
    %119 = arith.truncf %118 : vector<8x32xf32> to vector<8x32xbf16>
    %c0_55 = arith.constant 0 : index
    %c0_56 = arith.constant 0 : index
    %c0_57 = arith.constant 0 : index
    %120 = vector.load %arg16[%c0_55, %c0_56, %c0_57] : memref<1x32x256xbf16, #tpu.memory_space<vmem>>, vector<1x32x256xbf16>
    %121 = vector.shape_cast %120 : vector<1x32x256xbf16> to vector<32x256xbf16>
    %cst_58 = arith.constant dense<0.000000e+00> : vector<8x256xf32>
    %122 = tpu.matmul %119, %121, %cst_58 {dimension_numbers = #tpu.dot_dimension_numbers<[1], [0], [0], [1], [0, 0, 1, 1], [], []>} : vector<8x32xbf16>, vector<32x256xbf16>, vector<8x256xf32> -> vector<8x256xf32>
    %c0_59 = arith.constant 0 : index
    %c0_60 = arith.constant 0 : index
    %c0_61 = arith.constant 0 : index
    %123 = vector.load %arg17[%c0_59, %c0_60, %c0_61] : memref<1x1x256xf32, #tpu.memory_space<vmem>>, vector<1x1x256xf32>
    %124 = vector.shape_cast %123 : vector<1x1x256xf32> to vector<256xf32>
    %125 = vector.shape_cast %124 : vector<256xf32> to vector<1x256xf32>
    %126 = vector.broadcast %125 : vector<1x256xf32> to vector<8x256xf32>
    %127 = arith.addf %122, %126 : vector<8x256xf32>
    %cst_62 = arith.constant 0.000000e+00 : f32
    %128 = vector.broadcast %cst_62 : f32 to vector<8x256xf32>
    %129 = arith.maximumf %127, %128 : vector<8x256xf32>
    %130 = arith.truncf %129 : vector<8x256xf32> to vector<8x256xbf16>
    %c0_63 = arith.constant 0 : index
    %c0_64 = arith.constant 0 : index
    %c0_65 = arith.constant 0 : index
    %131 = vector.load %arg18[%c0_63, %c0_64, %c0_65] : memref<1x256x32xbf16, #tpu.memory_space<vmem>>, vector<1x256x32xbf16>
    %132 = vector.shape_cast %131 : vector<1x256x32xbf16> to vector<256x32xbf16>
    %cst_66 = arith.constant dense<0.000000e+00> : vector<8x32xf32>
    %133 = tpu.matmul %130, %132, %cst_66 {dimension_numbers = #tpu.dot_dimension_numbers<[1], [0], [0], [1], [0, 0, 1, 1], [], []>} : vector<8x256xbf16>, vector<256x32xbf16>, vector<8x32xf32> -> vector<8x32xf32>
    %c0_67 = arith.constant 0 : index
    %c0_68 = arith.constant 0 : index
    %c0_69 = arith.constant 0 : index
    %134 = vector.load %arg19[%c0_67, %c0_68, %c0_69] : memref<1x1x32xf32, #tpu.memory_space<vmem>>, vector<1x1x32xf32>
    %135 = vector.shape_cast %134 : vector<1x1x32xf32> to vector<32xf32>
    %136 = vector.shape_cast %135 : vector<32xf32> to vector<1x32xf32>
    %137 = vector.broadcast %136 : vector<1x32xf32> to vector<8x32xf32>
    %138 = arith.addf %133, %137 : vector<8x32xf32>
    %139 = arith.addf %90, %138 : vector<8x32xf32>
    %c0_70 = arith.constant 0 : index
    %c0_71 = arith.constant 0 : index
    %140 = vector.load %arg23[%c0_70, %c0_71] : memref<8x32xf32, #tpu.memory_space<vmem>>, vector<8x32xf32>
    tpu.vector_store %arg23[%c0_70, %c0_71], %139 {strides = array<i32>} : memref<8x32xf32, #tpu.memory_space<vmem>>, vector<8x32xf32>,
    %c1_i32 = arith.constant 1 : i32
    %141 = arith.cmpi eq, %arg1, %c1_i32 : i32
    %142 = arith.extui %141 : i1 to i32
    %c0_i32_72 = arith.constant 0 : i32
    %143 = arith.cmpi ne, %142, %c0_i32_72 : i32
    scf.if %143 {
      %c0_73 = arith.constant 0 : index
      %c0_74 = arith.constant 0 : index
      %144 = vector.load %arg20[%c0_73, %c0_74] : memref<1x32xf32, #tpu.memory_space<vmem>>, vector<1x32xf32>
      %145 = vector.shape_cast %144 : vector<1x32xf32> to vector<32xf32>
      %c0_75 = arith.constant 0 : index
      %c0_76 = arith.constant 0 : index
      %146 = vector.load %arg21[%c0_75, %c0_76] : memref<1x32xf32, #tpu.memory_space<vmem>>, vector<1x32xf32>
      %147 = vector.shape_cast %146 : vector<1x32xf32> to vector<32xf32>
      %cst_77 = arith.constant dense<0.000000e+00> : vector<8xf32>
      %148 = vector.multi_reduction <add>, %139, %cst_77 [1] : vector<8x32xf32> to vector<8xf32>
      %149 = vector.shape_cast %148 : vector<8xf32> to vector<8x1xf32>
      %cst_78 = arith.constant 3.200000e+01 : f32
      %150 = vector.broadcast %cst_78 : f32 to vector<8x1xf32>
      %151 = arith.divf %149, %150 : vector<8x1xf32>
      %152 = vector.broadcast %151 : vector<8x1xf32> to vector<8x32xf32>
      %153 = arith.subf %139, %152 : vector<8x32xf32>
      %154 = arith.mulf %153, %153 : vector<8x32xf32>
      %cst_79 = arith.constant dense<0.000000e+00> : vector<8xf32>
      %155 = vector.multi_reduction <add>, %154, %cst_79 [1] : vector<8x32xf32> to vector<8xf32>
      %156 = vector.shape_cast %155 : vector<8xf32> to vector<8x1xf32>
      %cst_80 = arith.constant 3.200000e+01 : f32
      %157 = vector.broadcast %cst_80 : f32 to vector<8x1xf32>
      %158 = arith.divf %156, %157 : vector<8x1xf32>
      %159 = vector.broadcast %151 : vector<8x1xf32> to vector<8x32xf32>
      %160 = arith.subf %139, %159 : vector<8x32xf32>
      %cst_81 = arith.constant 9.99999974E-6 : f32
      %161 = vector.broadcast %cst_81 : f32 to vector<8x1xf32>
      %162 = arith.addf %158, %161 : vector<8x1xf32>
      %163 = math.rsqrt %162 : vector<8x1xf32>
      %164 = vector.broadcast %163 : vector<8x1xf32> to vector<8x32xf32>
      %165 = arith.mulf %160, %164 : vector<8x32xf32>
      %166 = vector.shape_cast %145 : vector<32xf32> to vector<1x32xf32>
      %167 = vector.broadcast %166 : vector<1x32xf32> to vector<8x32xf32>
      %168 = arith.mulf %165, %167 : vector<8x32xf32>
      %169 = vector.shape_cast %147 : vector<32xf32> to vector<1x32xf32>
      %170 = vector.broadcast %169 : vector<1x32xf32> to vector<8x32xf32>
      %171 = arith.addf %168, %170 : vector<8x32xf32>
      %c0_82 = arith.constant 0 : index
      %c0_83 = arith.constant 0 : index
      %c0_84 = arith.constant 0 : index
      %172 = vector.load %arg22[%c0_82, %c0_83, %c0_84] : memref<1x8x32xf32, #tpu.memory_space<vmem>>, vector<1x8x32xf32>
      %173 = vector.shape_cast %172 : vector<1x8x32xf32> to vector<8x32xf32>
      %174 = vector.shape_cast %171 : vector<8x32xf32> to vector<1x8x32xf32>
      tpu.vector_store %arg22[%c0_82, %c0_83, %c0_84], %174 {strides = array<i32>} : memref<1x8x32xf32, #tpu.memory_space<vmem>>, vector<1x8x32xf32>,
    } else {
    }
    return
  }
  func.func @transform_0(%arg0: i32, %arg1: i32) -> (i32, i32, i32) {
    %c0_i32 = arith.constant 0 : i32
    %c0_i32_0 = arith.constant 0 : i32
    %c0_i32_1 = arith.constant 0 : i32
    return %arg0, %c0_i32, %c0_i32_0 : i32, i32, i32
  }
  func.func @transform_1(%arg0: i32, %arg1: i32) -> (i32, i32) {
    %c0_i32 = arith.constant 0 : i32
    %c0_i32_0 = arith.constant 0 : i32
    %c0_i32_1 = arith.constant 0 : i32
    return %c0_i32, %c0_i32_0 : i32, i32
  }
  func.func @transform_2(%arg0: i32, %arg1: i32) -> (i32, i32, i32) {
    %c0_i32 = arith.constant 0 : i32
    %c0_i32_0 = arith.constant 0 : i32
    %c0_i32_1 = arith.constant 0 : i32
    return %arg1, %c0_i32, %c0_i32_0 : i32, i32, i32
  }
  func.func @transform_3(%arg0: i32, %arg1: i32) -> (i32, i32, i32) {
    %c0_i32 = arith.constant 0 : i32
    %c0_i32_0 = arith.constant 0 : i32
    %c0_i32_1 = arith.constant 0 : i32
    return %arg1, %c0_i32, %c0_i32_0 : i32, i32, i32
  }
  func.func @transform_4(%arg0: i32, %arg1: i32) -> (i32, i32, i32) {
    %c0_i32 = arith.constant 0 : i32
    %c0_i32_0 = arith.constant 0 : i32
    %c0_i32_1 = arith.constant 0 : i32
    return %arg1, %c0_i32, %c0_i32_0 : i32, i32, i32
  }
  func.func @transform_5(%arg0: i32, %arg1: i32) -> (i32, i32, i32) {
    %c0_i32 = arith.constant 0 : i32
    %c0_i32_0 = arith.constant 0 : i32
    %c0_i32_1 = arith.constant 0 : i32
    return %arg1, %c0_i32, %c0_i32_0 : i32, i32, i32
  }
  func.func @transform_6(%arg0: i32, %arg1: i32) -> (i32, i32, i32) {
    %c0_i32 = arith.constant 0 : i32
    %c0_i32_0 = arith.constant 0 : i32
    %c0_i32_1 = arith.constant 0 : i32
    return %arg1, %c0_i32, %c0_i32_0 : i32, i32, i32
  }
  func.func @transform_7(%arg0: i32, %arg1: i32) -> (i32, i32, i32) {
    %c0_i32 = arith.constant 0 : i32
    %c0_i32_0 = arith.constant 0 : i32
    %c0_i32_1 = arith.constant 0 : i32
    return %arg1, %c0_i32, %c0_i32_0 : i32, i32, i32
  }
  func.func @transform_8(%arg0: i32, %arg1: i32) -> (i32, i32, i32) {
    %c0_i32 = arith.constant 0 : i32
    %c0_i32_0 = arith.constant 0 : i32
    %c0_i32_1 = arith.constant 0 : i32
    return %arg1, %c0_i32, %c0_i32_0 : i32, i32, i32
  }
  func.func @transform_9(%arg0: i32, %arg1: i32) -> (i32, i32, i32) {
    %c0_i32 = arith.constant 0 : i32
    %c0_i32_0 = arith.constant 0 : i32
    %c0_i32_1 = arith.constant 0 : i32
    return %arg1, %c0_i32, %c0_i32_0 : i32, i32, i32
  }
  func.func @transform_10(%arg0: i32, %arg1: i32) -> (i32, i32, i32) {
    %c0_i32 = arith.constant 0 : i32
    %c0_i32_0 = arith.constant 0 : i32
    %c0_i32_1 = arith.constant 0 : i32
    return %arg1, %c0_i32, %c0_i32_0 : i32, i32, i32
  }
  func.func @transform_11(%arg0: i32, %arg1: i32) -> (i32, i32, i32) {
    %c0_i32 = arith.constant 0 : i32
    %c0_i32_0 = arith.constant 0 : i32
    %c0_i32_1 = arith.constant 0 : i32
    return %arg1, %c0_i32, %c0_i32_0 : i32, i32, i32
  }
  func.func @transform_12(%arg0: i32, %arg1: i32) -> (i32, i32, i32) {
    %c0_i32 = arith.constant 0 : i32
    %c0_i32_0 = arith.constant 0 : i32
    %c0_i32_1 = arith.constant 0 : i32
    return %arg1, %c0_i32, %c0_i32_0 : i32, i32, i32
  }
  func.func @transform_13(%arg0: i32, %arg1: i32) -> (i32, i32, i32) {
    %c0_i32 = arith.constant 0 : i32
    %c0_i32_0 = arith.constant 0 : i32
    %c0_i32_1 = arith.constant 0 : i32
    return %arg1, %c0_i32, %c0_i32_0 : i32, i32, i32
  }
  func.func @transform_14(%arg0: i32, %arg1: i32) -> (i32, i32, i32) {
    %c0_i32 = arith.constant 0 : i32
    %c0_i32_0 = arith.constant 0 : i32
    %c0_i32_1 = arith.constant 0 : i32
    return %arg1, %c0_i32, %c0_i32_0 : i32, i32, i32
  }
  func.func @transform_15(%arg0: i32, %arg1: i32) -> (i32, i32, i32) {
    %c0_i32 = arith.constant 0 : i32
    %c0_i32_0 = arith.constant 0 : i32
    %c0_i32_1 = arith.constant 0 : i32
    return %arg1, %c0_i32, %c0_i32_0 : i32, i32, i32
  }
  func.func @transform_16(%arg0: i32, %arg1: i32) -> (i32, i32, i32) {
    %c0_i32 = arith.constant 0 : i32
    %c0_i32_0 = arith.constant 0 : i32
    %c0_i32_1 = arith.constant 0 : i32
    return %arg1, %c0_i32, %c0_i32_0 : i32, i32, i32
  }
  func.func @transform_17(%arg0: i32, %arg1: i32) -> (i32, i32, i32) {
    %c0_i32 = arith.constant 0 : i32
    %c0_i32_0 = arith.constant 0 : i32
    %c0_i32_1 = arith.constant 0 : i32
    return %arg1, %c0_i32, %c0_i32_0 : i32, i32, i32
  }
  func.func @transform_18(%arg0: i32, %arg1: i32) -> (i32, i32) {
    %c0_i32 = arith.constant 0 : i32
    %c0_i32_0 = arith.constant 0 : i32
    %c0_i32_1 = arith.constant 0 : i32
    return %c0_i32, %c0_i32_0 : i32, i32
  }
  func.func @transform_19(%arg0: i32, %arg1: i32) -> (i32, i32) {
    %c0_i32 = arith.constant 0 : i32
    %c0_i32_0 = arith.constant 0 : i32
    %c0_i32_1 = arith.constant 0 : i32
    return %c0_i32, %c0_i32_0 : i32, i32
  }
  func.func @transform_20(%arg0: i32, %arg1: i32) -> (i32, i32, i32) {
    %c0_i32 = arith.constant 0 : i32
    %c0_i32_0 = arith.constant 0 : i32
    %c0_i32_1 = arith.constant 0 : i32
    return %arg0, %c0_i32, %c0_i32_0 : i32, i32, i32
  }
}

</mosaic_0001>

<llo_original>
// kernel: tpu_custom_call.1
$region0: #{tpu_custom_call.1}
  #allocation0 [shape = 'u32[]', space=smem, size = 0x4, offset = 0x4, fixed_abs, tag = 'smem constant byte address 0x4 - core index']
  #allocation1 [shape = 'u32[144,128]{1,0:T(1,128)}', space=vmem, size = 0x12000, scoped, tag = 'internal scratch']
  #allocation2 [shape = 'f32[8,32]{1,0:T(8,128)}', space=vmem, size = 0x1000, scoped, tag = 'scratch operand']
  %s0 = inlined_call_operand.vmem [shape: f32[2,8,32], index: 0, kind: input, shape index: {}]
  %s1 = inlined_call_operand.vmem [shape: f32[8,32], index: 1, kind: input, shape index: {}]
  %s2 = inlined_call_operand.vmem [shape: f32[2,1,32], index: 2, kind: input, shape index: {}]
  %s3 = inlined_call_operand.vmem [shape: f32[2,1,32], index: 3, kind: input, shape index: {}]
  %s4 = inlined_call_operand.vmem [shape: bf16[2,32,32], index: 4, kind: input, shape index: {}]
  %s5 = inlined_call_operand.vmem [shape: f32[2,1,32], index: 5, kind: input, shape index: {}]
  %s6 = inlined_call_operand.vmem [shape: bf16[2,32,32], index: 6, kind: input, shape index: {}]
  %s7 = inlined_call_operand.vmem [shape: f32[2,1,32], index: 7, kind: input, shape index: {}]
  %s8 = inlined_call_operand.vmem [shape: bf16[2,32,32], index: 8, kind: input, shape index: {}]
  %s9 = inlined_call_operand.vmem [shape: f32[2,1,32], index: 9, kind: input, shape index: {}]
  %s10 = inlined_call_operand.vmem [shape: bf16[2,32,32], index: 10, kind: input, shape index: {}]
  %s11 = inlined_call_operand.vmem [shape: f32[2,1,32], index: 11, kind: input, shape index: {}]
  %s12 = inlined_call_operand.vmem [shape: f32[2,1,32], index: 12, kind: input, shape index: {}]
  %s13 = inlined_call_operand.vmem [shape: f32[2,1,32], index: 13, kind: input, shape index: {}]
  %s14 = inlined_call_operand.vmem [shape: bf16[2,32,256], index: 14, kind: input, shape index: {}]
  %s15 = inlined_call_operand.vmem [shape: f32[2,1,256], index: 15, kind: input, shape index: {}]
  %s16 = inlined_call_operand.vmem [shape: bf16[2,256,32], index: 16, kind: input, shape index: {}]
  %s17 = inlined_call_operand.vmem [shape: f32[2,1,32], index: 17, kind: input, shape index: {}]
  %s18 = inlined_call_operand.vmem [shape: f32[1,32], index: 18, kind: input, shape index: {}]
  %s19 = inlined_call_operand.vmem [shape: f32[1,32], index: 19, kind: input, shape index: {}]
  %s20 = inlined_call_operand.hbm [shape: f32[2,8,32], index: 20, kind: output, shape index: {}]
  %s21 = sld [smem:[#allocation0]]
  $region121: #{tpu_custom_call.1} parent=0
    _
  %s23 = ssub.s32 1, %s21
  %s24 = scalar_select 0, %s23, %s21
  $region1: #{tpu_custom_call.1} parent=0
    #allocation3 [shape = 'u8[8192]{0}', space=vmem, size = 0x2000, scoped, tag = 'output window, operand 0']
    #allocation4 [shape = 's32[2]{0}', space=sflag, size = 0x8, scoped, tag = 'scoped memory for tpu_custom_call.1']
    %25 = vsyncpa [#allocation4], 0
    %s26 = scalar_lea.sflag [#allocation4], 1
    %27 = vsyncpa %s26, 0
    loop: start=0, step=1, limit=6
    $region2: #{tpu_custom_call.1} parent=1 // loop_pre_header
      _
    $region3: #{tpu_custom_call.1} parent=1 // loop_header
      %s29 = sphi 0, %s33
      %p30 = scmp.ge.s32.totalorder %s29, 6
      %s36 = sphi 0, %s48
      %s37 = sphi 0, %s44
      %s38 = sphi 0, %s36
      %s39 = sphi 0, %s37
      %s40 = sphi 0, %s38
      %s41 = sphi 0, %s39
      %s51 = sphi 0, %s53
      %s54 = sphi 0, %s51
      %s55 = sphi 0, %s54
      %s71 = sphi 0, %s55
      %s75 = sphi 0, %s75
      %s77 = sphi 0, %s75
      %s78 = sphi 0, %s77
      %s92 = sphi 0, %s78
      %s98 = sphi 0, %s100
      %s101 = sphi 0, %s98
      %s102 = sphi 0, %s101
      %s118 = sphi 0, %s102
      %s124 = sphi 0, %s126
      %s127 = sphi 0, %s124
      %s128 = sphi 0, %s127
      %s144 = sphi 0, %s128
      %s150 = sphi 0, %s152
      %s153 = sphi 0, %s150
      %s154 = sphi 0, %s153
      %s170 = sphi 0, %s154
      %s176 = sphi 0, %s178
      %s179 = sphi 0, %s176
      %s180 = sphi 0, %s179
      %s196 = sphi 0, %s180
      %s202 = sphi 0, %s204
      %s205 = sphi 0, %s202
      %s206 = sphi 0, %s205
      %s222 = sphi 0, %s206
      %s228 = sphi 0, %s230
      %s231 = sphi 0, %s228
      %s232 = sphi 0, %s231
      %s248 = sphi 0, %s232
      %s254 = sphi 0, %s256
      %s257 = sphi 0, %s254
      %s258 = sphi 0, %s257
      %s274 = sphi 0, %s258
      %s280 = sphi 0, %s282
      %s283 = sphi 0, %s280
      %s284 = sphi 0, %s283
      %s300 = sphi 0, %s284
      %s306 = sphi 0, %s308
      %s309 = sphi 0, %s306
      %s310 = sphi 0, %s309
      %s326 = sphi 0, %s310
      %s332 = sphi 0, %s334
      %s335 = sphi 0, %s332
      %s336 = sphi 0, %s335
      %s352 = sphi 0, %s336
      %s358 = sphi 0, %s360
      %s361 = sphi 0, %s358
      %s362 = sphi 0, %s361
      %s378 = sphi 0, %s362
      %s384 = sphi 0, %s386
      %s387 = sphi 0, %s384
      %s388 = sphi 0, %s387
      %s404 = sphi 0, %s388
      %s410 = sphi 0, %s412
      %s413 = sphi 0, %s410
      %s414 = sphi 0, %s413
      %s430 = sphi 0, %s414
      %s436 = sphi 0, %s438
      %s439 = sphi 0, %s436
      %s440 = sphi 0, %s439
      %s456 = sphi 0, %s440
      %s462 = sphi 0, %s464
      %s465 = sphi 0, %s462
      %s466 = sphi 0, %s465
      %s482 = sphi 0, %s466
      %s488 = sphi 0, %s490
      %s491 = sphi 0, %s488
      %s492 = sphi 0, %s491
      %s508 = sphi 0, %s492
      %s512 = sphi 0, %s512
      %s514 = sphi 0, %s512
      %s515 = sphi 0, %s514
      %s529 = sphi 0, %s515
      %s533 = sphi 0, %s533
      %s535 = sphi 0, %s533
      %s536 = sphi 0, %s535
      %s550 = sphi 0, %s536
      %s556 = sphi 0, %s558
      %s559 = sphi 0, %s556
      %s560 = sphi 0, %s559
      %s576 = sphi 0, %s560
    $region4: #{tpu_custom_call.1} parent=1 // loop_header_branch
      %32 = sbr.rel (%p30) target = $region8
    $region5: #{tpu_custom_call.1} parent=1 // loop_body
      %s34 = ssub.s32 %s29, 1
      %s35 = ssub.s32 %s29, 2
      %s42 = sadd.s32 1, %s37
      %p43 = scmp.ge.s32.totalorder %s42, 2
      %s44 = scalar_select %p43, 0, %s42
      %s45 = sadd.s32 1, %s36
      %s46 = scalar_select %p43, %s45, %s36
      %p47 = scmp.ge.s32.totalorder %s46, 2
      %s48 = scalar_select %p47, 0, %s46
      %s49 = ssub.s32 %s36, %s48
      %p50 = scmp.eq.s32.totalorder %s49, 0
      %s52 = sadd.s32 %s51, 1
      %s53 = scalar_select %p50, %s51, %s52
      %p56 = pneg %p50
      %p57 = scmp.eq.s32.totalorder %s29, 3
      %p58 = por %p56, %p57
      %p59 = scmp.ne.s32.totalorder %s51, %s54
      %p60 = scmp.eq.s32.totalorder %s29, 0
      %p61 = por %p59, %p60
      %p62 = scmp.ne.s32.totalorder %s51, %s54
      %p63 = scmp.eq.s32.totalorder %s34, 3
      %p64 = por %p62, %p63
      %p65 = scmp.ne.s32.totalorder %s54, %s55
      %p66 = scmp.eq.s32.totalorder %s34, 0
      %p67 = por %p65, %p66
      %p68 = scmp.ne.s32.totalorder %s54, %s55
      %p69 = scmp.eq.s32.totalorder %s35, 3
      %p70 = por %p68, %p69
      %p72 = scmp.ne.s32.totalorder %s55, %s71
      %p73 = scmp.eq.s32.totalorder %s35, 0
      %p74 = por %p72, %p73
      %s76 = sadd.s32 %s75, 1
      %p79 = scmp.eq.s32.totalorder %s29, 3
      %p80 = scmp.ne.s32.totalorder %s75, %s77
      %p81 = scmp.eq.s32.totalorder %s29, 0
      %p82 = por %p80, %p81
      %p83 = scmp.ne.s32.totalorder %s75, %s77
      %p84 = scmp.eq.s32.totalorder %s34, 3
      %p85 = por %p83, %p84
      %p86 = scmp.ne.s32.totalorder %s77, %s78
      %p87 = scmp.eq.s32.totalorder %s34, 0
      %p88 = por %p86, %p87
      %p89 = scmp.ne.s32.totalorder %s77, %s78
      %p90 = scmp.eq.s32.totalorder %s35, 3
      %p91 = por %p89, %p90
      %p93 = scmp.ne.s32.totalorder %s78, %s92
      %p94 = scmp.eq.s32.totalorder %s35, 0
      %p95 = por %p93, %p94
      %s96 = ssub.s32 %s37, %s44
      %p97 = scmp.eq.s32.totalorder %s96, 0
      %s99 = sadd.s32 %s98, 1
      %s100 = scalar_select %p97, %s98, %s99
      %p103 = pneg %p97
      %p104 = scmp.eq.s32.totalorder %s29, 3
      %p105 = por %p103, %p104
      %p106 = scmp.ne.s32.totalorder %s98, %s101
      %p107 = scmp.eq.s32.totalorder %s29, 0
      %p108 = por %p106, %p107
      %p109 = scmp.ne.s32.totalorder %s98, %s101
      %p110 = scmp.eq.s32.totalorder %s34, 3
      %p111 = por %p109, %p110
      %p112 = scmp.ne.s32.totalorder %s101, %s102
      %p113 = scmp.eq.s32.totalorder %s34, 0
      %p114 = por %p112, %p113
      %p115 = scmp.ne.s32.totalorder %s101, %s102
      %p116 = scmp.eq.s32.totalorder %s35, 3
      %p117 = por %p115, %p116
      %p119 = scmp.ne.s32.totalorder %s102, %s118
      %p120 = scmp.eq.s32.totalorder %s35, 0
      %p121 = por %p119, %p120
      %s122 = ssub.s32 %s37, %s44
      %p123 = scmp.eq.s32.totalorder %s122, 0
      %s125 = sadd.s32 %s124, 1
      %s126 = scalar_select %p123, %s124, %s125
      %p129 = pneg %p123
      %p130 = scmp.eq.s32.totalorder %s29, 3
      %p131 = por %p129, %p130
      %p132 = scmp.ne.s32.totalorder %s124, %s127
      %p133 = scmp.eq.s32.totalorder %s29, 0
      %p134 = por %p132, %p133
      %p135 = scmp.ne.s32.totalorder %s124, %s127
      %p136 = scmp.eq.s32.totalorder %s34, 3
      %p137 = por %p135, %p136
      %p138 = scmp.ne.s32.totalorder %s127, %s128
      %p139 = scmp.eq.s32.totalorder %s34, 0
      %p140 = por %p138, %p139
      %p141 = scmp.ne.s32.totalorder %s127, %s128
      %p142 = scmp.eq.s32.totalorder %s35, 3
      %p143 = por %p141, %p142
      %p145 = scmp.ne.s32.totalorder %s128, %s144
      %p146 = scmp.eq.s32.totalorder %s35, 0
      %p147 = por %p145, %p146
      %s148 = ssub.s32 %s37, %s44
      %p149 = scmp.eq.s32.totalorder %s148, 0
      %s151 = sadd.s32 %s150, 1
      %s152 = scalar_select %p149, %s150, %s151
      %p155 = pneg %p149
      %p156 = scmp.eq.s32.totalorder %s29, 3
      %p157 = por %p155, %p156
      %p158 = scmp.ne.s32.totalorder %s150, %s153
      %p159 = scmp.eq.s32.totalorder %s29, 0
      %p160 = por %p158, %p159
      %p161 = scmp.ne.s32.totalorder %s150, %s153
      %p162 = scmp.eq.s32.totalorder %s34, 3
      %p163 = por %p161, %p162
      %p164 = scmp.ne.s32.totalorder %s153, %s154
      %p165 = scmp.eq.s32.totalorder %s34, 0
      %p166 = por %p164, %p165
      %p167 = scmp.ne.s32.totalorder %s153, %s154
      %p168 = scmp.eq.s32.totalorder %s35, 3
      %p169 = por %p167, %p168
      %p171 = scmp.ne.s32.totalorder %s154, %s170
      %p172 = scmp.eq.s32.totalorder %s35, 0
      %p173 = por %p171, %p172
      %s174 = ssub.s32 %s37, %s44
      %p175 = scmp.eq.s32.totalorder %s174, 0
      %s177 = sadd.s32 %s176, 1
      %s178 = scalar_select %p175, %s176, %s177
      %p181 = pneg %p175
      %p182 = scmp.eq.s32.totalorder %s29, 3
      %p183 = por %p181, %p182
      %p184 = scmp.ne.s32.totalorder %s176, %s179
      %p185 = scmp.eq.s32.totalorder %s29, 0
      %p186 = por %p184, %p185
      %p187 = scmp.ne.s32.totalorder %s176, %s179
      %p188 = scmp.eq.s32.totalorder %s34, 3
      %p189 = por %p187, %p188
      %p190 = scmp.ne.s32.totalorder %s179, %s180
      %p191 = scmp.eq.s32.totalorder %s34, 0
      %p192 = por %p190, %p191
      %p193 = scmp.ne.s32.totalorder %s179, %s180
      %p194 = scmp.eq.s32.totalorder %s35, 3
      %p195 = por %p193, %p194
      %p197 = scmp.ne.s32.totalorder %s180, %s196
      %p198 = scmp.eq.s32.totalorder %s35, 0
      %p199 = por %p197, %p198
      %s200 = ssub.s32 %s37, %s44
      %p201 = scmp.eq.s32.totalorder %s200, 0
      %s203 = sadd.s32 %s202, 1
      %s204 = scalar_select %p201, %s202, %s203
      %p207 = pneg %p201
      %p208 = scmp.eq.s32.totalorder %s29, 3
      %p209 = por %p207, %p208
      %p210 = scmp.ne.s32.totalorder %s202, %s205
      %p211 = scmp.eq.s32.totalorder %s29, 0
      %p212 = por %p210, %p211
      %p213 = scmp.ne.s32.totalorder %s202, %s205
      %p214 = scmp.eq.s32.totalorder %s34, 3
      %p215 = por %p213, %p214
      %p216 = scmp.ne.s32.totalorder %s205, %s206
      %p217 = scmp.eq.s32.totalorder %s34, 0
      %p218 = por %p216, %p217
      %p219 = scmp.ne.s32.totalorder %s205, %s206
      %p220 = scmp.eq.s32.totalorder %s35, 3
      %p221 = por %p219, %p220
      %p223 = scmp.ne.s32.totalorder %s206, %s222
      %p224 = scmp.eq.s32.totalorder %s35, 0
      %p225 = por %p223, %p224
      %s226 = ssub.s32 %s37, %s44
      %p227 = scmp.eq.s32.totalorder %s226, 0
      %s229 = sadd.s32 %s228, 1
      %s230 = scalar_select %p227, %s228, %s229
      %p233 = pneg %p227
      %p234 = scmp.eq.s32.totalorder %s29, 3
      %p235 = por %p233, %p234
      %p236 = scmp.ne.s32.totalorder %s228, %s231
      %p237 = scmp.eq.s32.totalorder %s29, 0
      %p238 = por %p236, %p237
      %p239 = scmp.ne.s32.totalorder %s228, %s231
      %p240 = scmp.eq.s32.totalorder %s34, 3
      %p241 = por %p239, %p240
      %p242 = scmp.ne.s32.totalorder %s231, %s232
      %p243 = scmp.eq.s32.totalorder %s34, 0
      %p244 = por %p242, %p243
      %p245 = scmp.ne.s32.totalorder %s231, %s232
      %p246 = scmp.eq.s32.totalorder %s35, 3
      %p247 = por %p245, %p246
      %p249 = scmp.ne.s32.totalorder %s232, %s248
      %p250 = scmp.eq.s32.totalorder %s35, 0
      %p251 = por %p249, %p250
      %s252 = ssub.s32 %s37, %s44
      %p253 = scmp.eq.s32.totalorder %s252, 0
      %s255 = sadd.s32 %s254, 1
      %s256 = scalar_select %p253, %s254, %s255
      %p259 = pneg %p253
      %p260 = scmp.eq.s32.totalorder %s29, 3
      %p261 = por %p259, %p260
      %p262 = scmp.ne.s32.totalorder %s254, %s257
      %p263 = scmp.eq.s32.totalorder %s29, 0
      %p264 = por %p262, %p263
      %p265 = scmp.ne.s32.totalorder %s254, %s257
      %p266 = scmp.eq.s32.totalorder %s34, 3
      %p267 = por %p265, %p266
      %p268 = scmp.ne.s32.totalorder %s257, %s258
      %p269 = scmp.eq.s32.totalorder %s34, 0
      %p270 = por %p268, %p269
      %p271 = scmp.ne.s32.totalorder %s257, %s258
      %p272 = scmp.eq.s32.totalorder %s35, 3
      %p273 = por %p271, %p272
      %p275 = scmp.ne.s32.totalorder %s258, %s274
      %p276 = scmp.eq.s32.totalorder %s35, 0
      %p277 = por %p275, %p276
      %s278 = ssub.s32 %s37, %s44
      %p279 = scmp.eq.s32.totalorder %s278, 0
      %s281 = sadd.s32 %s280, 1
      %s282 = scalar_select %p279, %s280, %s281
      %p285 = pneg %p279
      %p286 = scmp.eq.s32.totalorder %s29, 3
      %p287 = por %p285, %p286
      %p288 = scmp.ne.s32.totalorder %s280, %s283
      %p289 = scmp.eq.s32.totalorder %s29, 0
      %p290 = por %p288, %p289
      %p291 = scmp.ne.s32.totalorder %s280, %s283
      %p292 = scmp.eq.s32.totalorder %s34, 3
      %p293 = por %p291, %p292
      %p294 = scmp.ne.s32.totalorder %s283, %s284
      %p295 = scmp.eq.s32.totalorder %s34, 0
      %p296 = por %p294, %p295
      %p297 = scmp.ne.s32.totalorder %s283, %s284
      %p298 = scmp.eq.s32.totalorder %s35, 3
      %p299 = por %p297, %p298
      %p301 = scmp.ne.s32.totalorder %s284, %s300
      %p302 = scmp.eq.s32.totalorder %s35, 0
      %p303 = por %p301, %p302
      %s304 = ssub.s32 %s37, %s44
      %p305 = scmp.eq.s32.totalorder %s304, 0
      %s307 = sadd.s32 %s306, 1
      %s308 = scalar_select %p305, %s306, %s307
      %p311 = pneg %p305
      %p312 = scmp.eq.s32.totalorder %s29, 3
      %p313 = por %p311, %p312
      %p314 = scmp.ne.s32.totalorder %s306, %s309
      %p315 = scmp.eq.s32.totalorder %s29, 0
      %p316 = por %p314, %p315
      %p317 = scmp.ne.s32.totalorder %s306, %s309
      %p318 = scmp.eq.s32.totalorder %s34, 3
      %p319 = por %p317, %p318
      %p320 = scmp.ne.s32.totalorder %s309, %s310
      %p321 = scmp.eq.s32.totalorder %s34, 0
      %p322 = por %p320, %p321
      %p323 = scmp.ne.s32.totalorder %s309, %s310
      %p324 = scmp.eq.s32.totalorder %s35, 3
      %p325 = por %p323, %p324
      %p327 = scmp.ne.s32.totalorder %s310, %s326
      %p328 = scmp.eq.s32.totalorder %s35, 0
      %p329 = por %p327, %p328
      %s330 = ssub.s32 %s37, %s44
      %p331 = scmp.eq.s32.totalorder %s330, 0
      %s333 = sadd.s32 %s332, 1
      %s334 = scalar_select %p331, %s332, %s333
      %p337 = pneg %p331
      %p338 = scmp.eq.s32.totalorder %s29, 3
      %p339 = por %p337, %p338
      %p340 = scmp.ne.s32.totalorder %s332, %s335
      %p341 = scmp.eq.s32.totalorder %s29, 0
      %p342 = por %p340, %p341
      %p343 = scmp.ne.s32.totalorder %s332, %s335
      %p344 = scmp.eq.s32.totalorder %s34, 3
      %p345 = por %p343, %p344
      %p346 = scmp.ne.s32.totalorder %s335, %s336
      %p347 = scmp.eq.s32.totalorder %s34, 0
      %p348 = por %p346, %p347
      %p349 = scmp.ne.s32.totalorder %s335, %s336
      %p350 = scmp.eq.s32.totalorder %s35, 3
      %p351 = por %p349, %p350
      %p353 = scmp.ne.s32.totalorder %s336, %s352
      %p354 = scmp.eq.s32.totalorder %s35, 0
      %p355 = por %p353, %p354
      %s356 = ssub.s32 %s37, %s44
      %p357 = scmp.eq.s32.totalorder %s356, 0
      %s359 = sadd.s32 %s358, 1
      %s360 = scalar_select %p357, %s358, %s359
      %p363 = pneg %p357
      %p364 = scmp.eq.s32.totalorder %s29, 3
      %p365 = por %p363, %p364
      %p366 = scmp.ne.s32.totalorder %s358, %s361
      %p367 = scmp.eq.s32.totalorder %s29, 0
      %p368 = por %p366, %p367
      %p369 = scmp.ne.s32.totalorder %s358, %s361
      %p370 = scmp.eq.s32.totalorder %s34, 3
      %p371 = por %p369, %p370
      %p372 = scmp.ne.s32.totalorder %s361, %s362
      %p373 = scmp.eq.s32.totalorder %s34, 0
      %p374 = por %p372, %p373
      %p375 = scmp.ne.s32.totalorder %s361, %s362
      %p376 = scmp.eq.s32.totalorder %s35, 3
      %p377 = por %p375, %p376
      %p379 = scmp.ne.s32.totalorder %s362, %s378
      %p380 = scmp.eq.s32.totalorder %s35, 0
      %p381 = por %p379, %p380
      %s382 = ssub.s32 %s37, %s44
      %p383 = scmp.eq.s32.totalorder %s382, 0
      %s385 = sadd.s32 %s384, 1
      %s386 = scalar_select %p383, %s384, %s385
      %p389 = pneg %p383
      %p390 = scmp.eq.s32.totalorder %s29, 3
      %p391 = por %p389, %p390
      %p392 = scmp.ne.s32.totalorder %s384, %s387
      %p393 = scmp.eq.s32.totalorder %s29, 0
      %p394 = por %p392, %p393
      %p395 = scmp.ne.s32.totalorder %s384, %s387
      %p396 = scmp.eq.s32.totalorder %s34, 3
      %p397 = por %p395, %p396
      %p398 = scmp.ne.s32.totalorder %s387, %s388
      %p399 = scmp.eq.s32.totalorder %s34, 0
      %p400 = por %p398, %p399
      %p401 = scmp.ne.s32.totalorder %s387, %s388
      %p402 = scmp.eq.s32.totalorder %s35, 3
      %p403 = por %p401, %p402
      %p405 = scmp.ne.s32.totalorder %s388, %s404
      %p406 = scmp.eq.s32.totalorder %s35, 0
      %p407 = por %p405, %p406
      %s408 = ssub.s32 %s37, %s44
      %p409 = scmp.eq.s32.totalorder %s408, 0
      %s411 = sadd.s32 %s410, 1
      %s412 = scalar_select %p409, %s410, %s411
      %p415 = pneg %p409
      %p416 = scmp.eq.s32.totalorder %s29, 3
      %p417 = por %p415, %p416
      %p418 = scmp.ne.s32.totalorder %s410, %s413
      %p419 = scmp.eq.s32.totalorder %s29, 0
      %p420 = por %p418, %p419
      %p421 = scmp.ne.s32.totalorder %s410, %s413
      %p422 = scmp.eq.s32.totalorder %s34, 3
      %p423 = por %p421, %p422
      %p424 = scmp.ne.s32.totalorder %s413, %s414
      %p425 = scmp.eq.s32.totalorder %s34, 0
      %p426 = por %p424, %p425
      %p427 = scmp.ne.s32.totalorder %s413, %s414
      %p428 = scmp.eq.s32.totalorder %s35, 3
      %p429 = por %p427, %p428
      %p431 = scmp.ne.s32.totalorder %s414, %s430
      %p432 = scmp.eq.s32.totalorder %s35, 0
      %p433 = por %p431, %p432
      %s434 = ssub.s32 %s37, %s44
      %p435 = scmp.eq.s32.totalorder %s434, 0
      %s437 = sadd.s32 %s436, 1
      %s438 = scalar_select %p435, %s436, %s437
      %p441 = pneg %p435
      %p442 = scmp.eq.s32.totalorder %s29, 3
      %p443 = por %p441, %p442
      %p444 = scmp.ne.s32.totalorder %s436, %s439
      %p445 = scmp.eq.s32.totalorder %s29, 0
      %p446 = por %p444, %p445
      %p447 = scmp.ne.s32.totalorder %s436, %s439
      %p448 = scmp.eq.s32.totalorder %s34, 3
      %p449 = por %p447, %p448
      %p450 = scmp.ne.s32.totalorder %s439, %s440
      %p451 = scmp.eq.s32.totalorder %s34, 0
      %p452 = por %p450, %p451
      %p453 = scmp.ne.s32.totalorder %s439, %s440
      %p454 = scmp.eq.s32.totalorder %s35, 3
      %p455 = por %p453, %p454
      %p457 = scmp.ne.s32.totalorder %s440, %s456
      %p458 = scmp.eq.s32.totalorder %s35, 0
      %p459 = por %p457, %p458
      %s460 = ssub.s32 %s37, %s44
      %p461 = scmp.eq.s32.totalorder %s460, 0
      %s463 = sadd.s32 %s462, 1
      %s464 = scalar_select %p461, %s462, %s463
      %p467 = pneg %p461
      %p468 = scmp.eq.s32.totalorder %s29, 3
      %p469 = por %p467, %p468
      %p470 = scmp.ne.s32.totalorder %s462, %s465
      %p471 = scmp.eq.s32.totalorder %s29, 0
      %p472 = por %p470, %p471
      %p473 = scmp.ne.s32.totalorder %s462, %s465
      %p474 = scmp.eq.s32.totalorder %s34, 3
      %p475 = por %p473, %p474
      %p476 = scmp.ne.s32.totalorder %s465, %s466
      %p477 = scmp.eq.s32.totalorder %s34, 0
      %p478 = por %p476, %p477
      %p479 = scmp.ne.s32.totalorder %s465, %s466
      %p480 = scmp.eq.s32.totalorder %s35, 3
      %p481 = por %p479, %p480
      %p483 = scmp.ne.s32.totalorder %s466, %s482
      %p484 = scmp.eq.s32.totalorder %s35, 0
      %p485 = por %p483, %p484
      %s486 = ssub.s32 %s37, %s44
      %p487 = scmp.eq.s32.totalorder %s486, 0
      %s489 = sadd.s32 %s488, 1
      %s490 = scalar_select %p487, %s488, %s489
      %p493 = pneg %p487
      %p494 = scmp.eq.s32.totalorder %s29, 3
      %p495 = por %p493, %p494
      %p496 = scmp.ne.s32.totalorder %s488, %s491
      %p497 = scmp.eq.s32.totalorder %s29, 0
      %p498 = por %p496, %p497
      %p499 = scmp.ne.s32.totalorder %s488, %s491
      %p500 = scmp.eq.s32.totalorder %s34, 3
      %p501 = por %p499, %p500
      %p502 = scmp.ne.s32.totalorder %s491, %s492
      %p503 = scmp.eq.s32.totalorder %s34, 0
      %p504 = por %p502, %p503
      %p505 = scmp.ne.s32.totalorder %s491, %s492
      %p506 = scmp.eq.s32.totalorder %s35, 3
      %p507 = por %p505, %p506
      %p509 = scmp.ne.s32.totalorder %s492, %s508
      %p510 = scmp.eq.s32.totalorder %s35, 0
      %p511 = por %p509, %p510
      %s513 = sadd.s32 %s512, 1
      %p516 = scmp.eq.s32.totalorder %s29, 3
      %p517 = scmp.ne.s32.totalorder %s512, %s514
      %p518 = scmp.eq.s32.totalorder %s29, 0
      %p519 = por %p517, %p518
      %p520 = scmp.ne.s32.totalorder %s512, %s514
      %p521 = scmp.eq.s32.totalorder %s34, 3
      %p522 = por %p520, %p521
      %p523 = scmp.ne.s32.totalorder %s514, %s515
      %p524 = scmp.eq.s32.totalorder %s34, 0
      %p525 = por %p523, %p524
      %p526 = scmp.ne.s32.totalorder %s514, %s515
      %p527 = scmp.eq.s32.totalorder %s35, 3
      %p528 = por %p526, %p527
      %p530 = scmp.ne.s32.totalorder %s515, %s529
      %p531 = scmp.eq.s32.totalorder %s35, 0
      %p532 = por %p530, %p531
      %s534 = sadd.s32 %s533, 1
      %p537 = scmp.eq.s32.totalorder %s29, 3
      %p538 = scmp.ne.s32.totalorder %s533, %s535
      %p539 = scmp.eq.s32.totalorder %s29, 0
      %p540 = por %p538, %p539
      %p541 = scmp.ne.s32.totalorder %s533, %s535
      %p542 = scmp.eq.s32.totalorder %s34, 3
      %p543 = por %p541, %p542
      %p544 = scmp.ne.s32.totalorder %s535, %s536
      %p545 = scmp.eq.s32.totalorder %s34, 0
      %p546 = por %p544, %p545
      %p547 = scmp.ne.s32.totalorder %s535, %s536
      %p548 = scmp.eq.s32.totalorder %s35, 3
      %p549 = por %p547, %p548
      %p551 = scmp.ne.s32.totalorder %s536, %s550
      %p552 = scmp.eq.s32.totalorder %s35, 0
      %p553 = por %p551, %p552
      %s554 = ssub.s32 %s36, %s48
      %p555 = scmp.eq.s32.totalorder %s554, 0
      %s557 = sadd.s32 %s556, 1
      %s558 = scalar_select %p555, %s556, %s557
      %p561 = pneg %p555
      %p562 = scmp.eq.s32.totalorder %s29, 3
      %p563 = por %p561, %p562
      %p564 = scmp.ne.s32.totalorder %s556, %s559
      %p565 = scmp.eq.s32.totalorder %s29, 0
      %p566 = por %p564, %p565
      %p567 = scmp.ne.s32.totalorder %s556, %s559
      %p568 = scmp.eq.s32.totalorder %s34, 3
      %p569 = por %p567, %p568
      %p570 = scmp.ne.s32.totalorder %s559, %s560
      %p571 = scmp.eq.s32.totalorder %s34, 0
      %p572 = por %p570, %p571
      %p573 = scmp.ne.s32.totalorder %s559, %s560
      %p574 = scmp.eq.s32.totalorder %s35, 3
      %p575 = por %p573, %p574
      %p577 = scmp.ne.s32.totalorder %s560, %s576
      %p578 = scmp.eq.s32.totalorder %s35, 0
      %p579 = por %p577, %p578
      %p580 = scmp.le.s32.totalorder 1, %s29
      %p581 = scmp.lt.s32.totalorder %s29, 5
      %p582 = pnand %p580, %p581
      %p583 = pneg %p582
      // Predicated region
      $region9: #{tpu_custom_call.1} parent=5 // pred_check
        _
      $region10: #{tpu_custom_call.1} parent=5 // pred_check_branch
        %585 = sbr.rel (%p582) target = $region12
      $region11: #{tpu_custom_call.1} parent=5 // pred_region
        %s586 = ssub.s32 %s29, 1
        // Predicated region
        $region13: #{tpu_custom_call.1} parent=11 // pred_check
          %p587 = pneg %p88
        $region14: #{tpu_custom_call.1} parent=11 // pred_check_branch
          %589 = sbr.rel (%p587) target = $region16
        $region15: #{tpu_custom_call.1} parent=11 // pred_region
          _
        $region16: #{tpu_custom_call.1} parent=11 // pred_fallthru
          _
        // Predicated region
        $region17: #{tpu_custom_call.1} parent=11 // pred_check
          %p590 = pneg %p525
        $region18: #{tpu_custom_call.1} parent=11 // pred_check_branch
          %592 = sbr.rel (%p590) target = $region20
        $region19: #{tpu_custom_call.1} parent=11 // pred_region
          _
        $region20: #{tpu_custom_call.1} parent=11 // pred_fallthru
          _
        // Predicated region
        $region21: #{tpu_custom_call.1} parent=11 // pred_check
          %p593 = pneg %p546
        $region22: #{tpu_custom_call.1} parent=11 // pred_check_branch
          %595 = sbr.rel (%p593) target = $region24
        $region23: #{tpu_custom_call.1} parent=11 // pred_region
          _
        $region24: #{tpu_custom_call.1} parent=11 // pred_fallthru
          _
      $region12: #{tpu_custom_call.1} parent=5 // pred_fallthru
        _
      %p596 = scmp.lt.s32.totalorder %s29, 4
      // Predicated region
      $region25: #{tpu_custom_call.1} parent=5 // pred_check
        %p597 = pneg %p596
      $region26: #{tpu_custom_call.1} parent=5 // pred_check_branch
        %599 = sbr.rel (%p597) target = $region28
      $region27: #{tpu_custom_call.1} parent=5 // pred_region
        // Predicated region
        $region29: #{tpu_custom_call.1} parent=27 // pred_check
          %p600 = pneg %p61
        $region30: #{tpu_custom_call.1} parent=27 // pred_check_branch
          %602 = sbr.rel (%p600) target = $region32
        $region31: #{tpu_custom_call.1} parent=27 // pred_region
          %p603 = scmp.lt.s32.totalorder %s36, 1
          %s604 = scalar_select %p603, %s36, 1
          %s605 = smul.addr %s604, 8
          %s606 = scalar_lea.vmem %s0, %s605
        $region32: #{tpu_custom_call.1} parent=27 // pred_fallthru
          _
        // Predicated region
        $region33: #{tpu_custom_call.1} parent=27 // pred_check
          %p607 = pneg %p108
        $region34: #{tpu_custom_call.1} parent=27 // pred_check_branch
          %609 = sbr.rel (%p607) target = $region36
        $region35: #{tpu_custom_call.1} parent=27 // pred_region
          %p610 = scmp.lt.s32.totalorder %s37, 1
          %s611 = scalar_select %p610, %s37, 1
          %s612 = scalar_lea.vmem %s2, %s611
        $region36: #{tpu_custom_call.1} parent=27 // pred_fallthru
          _
        // Predicated region
        $region37: #{tpu_custom_call.1} parent=27 // pred_check
          %p613 = pneg %p134
        $region38: #{tpu_custom_call.1} parent=27 // pred_check_branch
          %615 = sbr.rel (%p613) target = $region40
        $region39: #{tpu_custom_call.1} parent=27 // pred_region
          %p616 = scmp.lt.s32.totalorder %s37, 1
          %s617 = scalar_select %p616, %s37, 1
          %s618 = scalar_lea.vmem %s3, %s617
        $region40: #{tpu_custom_call.1} parent=27 // pred_fallthru
          _
        // Predicated region
        $region41: #{tpu_custom_call.1} parent=27 // pred_check
          %p619 = pneg %p160
        $region42: #{tpu_custom_call.1} parent=27 // pred_check_branch
          %621 = sbr.rel (%p619) target = $region44
        $region43: #{tpu_custom_call.1} parent=27 // pred_region
          %p622 = scmp.lt.s32.totalorder %s37, 1
          %s623 = scalar_select %p622, %s37, 1
          %s624 = smul.addr %s623, 4
          %s625 = smul.addr %s624, 4
          %s626 = scalar_lea.vmem %s4, %s625
        $region44: #{tpu_custom_call.1} parent=27 // pred_fallthru
          _
        // Predicated region
        $region45: #{tpu_custom_call.1} parent=27 // pred_check
          %p627 = pneg %p186
        $region46: #{tpu_custom_call.1} parent=27 // pred_check_branch
          %629 = sbr.rel (%p627) target = $region48
        $region47: #{tpu_custom_call.1} parent=27 // pred_region
          %p630 = scmp.lt.s32.totalorder %s37, 1
          %s631 = scalar_select %p630, %s37, 1
          %s632 = scalar_lea.vmem %s5, %s631
        $region48: #{tpu_custom_call.1} parent=27 // pred_fallthru
          _
        // Predicated region
        $region49: #{tpu_custom_call.1} parent=27 // pred_check
          %p633 = pneg %p212
        $region50: #{tpu_custom_call.1} parent=27 // pred_check_branch
          %635 = sbr.rel (%p633) target = $region52
        $region51: #{tpu_custom_call.1} parent=27 // pred_region
          %p636 = scmp.lt.s32.totalorder %s37, 1
          %s637 = scalar_select %p636, %s37, 1
          %s638 = smul.addr %s637, 4
          %s639 = smul.addr %s638, 4
          %s640 = scalar_lea.vmem %s6, %s639
        $region52: #{tpu_custom_call.1} parent=27 // pred_fallthru
          _
        // Predicated region
        $region53: #{tpu_custom_call.1} parent=27 // pred_check
          %p641 = pneg %p238
        $region54: #{tpu_custom_call.1} parent=27 // pred_check_branch
          %643 = sbr.rel (%p641) target = $region56
        $region55: #{tpu_custom_call.1} parent=27 // pred_region
          %p644 = scmp.lt.s32.totalorder %s37, 1
          %s645 = scalar_select %p644, %s37, 1
          %s646 = scalar_lea.vmem %s7, %s645
        $region56: #{tpu_custom_call.1} parent=27 // pred_fallthru
          _
        // Predicated region
        $region57: #{tpu_custom_call.1} parent=27 // pred_check
          %p647 = pneg %p264
        $region58: #{tpu_custom_call.1} parent=27 // pred_check_branch
          %649 = sbr.rel (%p647) target = $region60
        $region59: #{tpu_custom_call.1} parent=27 // pred_region
          %p650 = scmp.lt.s32.totalorder %s37, 1
          %s651 = scalar_select %p650, %s37, 1
          %s652 = smul.addr %s651, 4
          %s653 = smul.addr %s652, 4
          %s654 = scalar_lea.vmem %s8, %s653
        $region60: #{tpu_custom_call.1} parent=27 // pred_fallthru
          _
        // Predicated region
        $region61: #{tpu_custom_call.1} parent=27 // pred_check
          %p655 = pneg %p290
        $region62: #{tpu_custom_call.1} parent=27 // pred_check_branch
          %657 = sbr.rel (%p655) target = $region64
        $region63: #{tpu_custom_call.1} parent=27 // pred_region
          %p658 = scmp.lt.s32.totalorder %s37, 1
          %s659 = scalar_select %p658, %s37, 1
          %s660 = scalar_lea.vmem %s9, %s659
        $region64: #{tpu_custom_call.1} parent=27 // pred_fallthru
          _
        // Predicated region
        $region65: #{tpu_custom_call.1} parent=27 // pred_check
          %p661 = pneg %p316
        $region66: #{tpu_custom_call.1} parent=27 // pred_check_branch
          %663 = sbr.rel (%p661) target = $region68
        $region67: #{tpu_custom_call.1} parent=27 // pred_region
          %p664 = scmp.lt.s32.totalorder %s37, 1
          %s665 = scalar_select %p664, %s37, 1
          %s666 = smul.addr %s665, 4
          %s667 = smul.addr %s666, 4
          %s668 = scalar_lea.vmem %s10, %s667
        $region68: #{tpu_custom_call.1} parent=27 // pred_fallthru
          _
        // Predicated region
        $region69: #{tpu_custom_call.1} parent=27 // pred_check
          %p669 = pneg %p342
        $region70: #{tpu_custom_call.1} parent=27 // pred_check_branch
          %671 = sbr.rel (%p669) target = $region72
        $region71: #{tpu_custom_call.1} parent=27 // pred_region
          %p672 = scmp.lt.s32.totalorder %s37, 1
          %s673 = scalar_select %p672, %s37, 1
          %s674 = scalar_lea.vmem %s11, %s673
        $region72: #{tpu_custom_call.1} parent=27 // pred_fallthru
          _
        // Predicated region
        $region73: #{tpu_custom_call.1} parent=27 // pred_check
          %p675 = pneg %p368
        $region74: #{tpu_custom_call.1} parent=27 // pred_check_branch
          %677 = sbr.rel (%p675) target = $region76
        $region75: #{tpu_custom_call.1} parent=27 // pred_region
          %p678 = scmp.lt.s32.totalorder %s37, 1
          %s679 = scalar_select %p678, %s37, 1
          %s680 = scalar_lea.vmem %s12, %s679
        $region76: #{tpu_custom_call.1} parent=27 // pred_fallthru
          _
        // Predicated region
        $region77: #{tpu_custom_call.1} parent=27 // pred_check
          %p681 = pneg %p394
        $region78: #{tpu_custom_call.1} parent=27 // pred_check_branch
          %683 = sbr.rel (%p681) target = $region80
        $region79: #{tpu_custom_call.1} parent=27 // pred_region
          %p684 = scmp.lt.s32.totalorder %s37, 1
          %s685 = scalar_select %p684, %s37, 1
          %s686 = scalar_lea.vmem %s13, %s685
        $region80: #{tpu_custom_call.1} parent=27 // pred_fallthru
          _
        // Predicated region
        $region81: #{tpu_custom_call.1} parent=27 // pred_check
          %p687 = pneg %p420
        $region82: #{tpu_custom_call.1} parent=27 // pred_check_branch
          %689 = sbr.rel (%p687) target = $region84
        $region83: #{tpu_custom_call.1} parent=27 // pred_region
          %p690 = scmp.lt.s32.totalorder %s37, 1
          %s691 = scalar_select %p690, %s37, 1
          %s692 = smul.addr %s691, 8
          %s693 = smul.addr %s692, 4
          %s694 = scalar_lea.vmem %s14, %s693
        $region84: #{tpu_custom_call.1} parent=27 // pred_fallthru
          _
        // Predicated region
        $region85: #{tpu_custom_call.1} parent=27 // pred_check
          %p695 = pneg %p446
        $region86: #{tpu_custom_call.1} parent=27 // pred_check_branch
          %697 = sbr.rel (%p695) target = $region88
        $region87: #{tpu_custom_call.1} parent=27 // pred_region
          %p698 = scmp.lt.s32.totalorder %s37, 1
          %s699 = scalar_select %p698, %s37, 1
          %s700 = smul.addr %s699, 2
          %s701 = scalar_lea.vmem %s15, %s700
        $region88: #{tpu_custom_call.1} parent=27 // pred_fallthru
          _
        // Predicated region
        $region89: #{tpu_custom_call.1} parent=27 // pred_check
          %p702 = pneg %p472
        $region90: #{tpu_custom_call.1} parent=27 // pred_check_branch
          %704 = sbr.rel (%p702) target = $region92
        $region91: #{tpu_custom_call.1} parent=27 // pred_region
          %p705 = scmp.lt.s32.totalorder %s37, 1
          %s706 = scalar_select %p705, %s37, 1
          %s707 = smul.addr %s706, 32
          %s708 = smul.addr %s707, 4
          %s709 = scalar_lea.vmem %s16, %s708
        $region92: #{tpu_custom_call.1} parent=27 // pred_fallthru
          _
        // Predicated region
        $region93: #{tpu_custom_call.1} parent=27 // pred_check
          %p710 = pneg %p498
        $region94: #{tpu_custom_call.1} parent=27 // pred_check_branch
          %712 = sbr.rel (%p710) target = $region96
        $region95: #{tpu_custom_call.1} parent=27 // pred_region
          %p713 = scmp.lt.s32.totalorder %s37, 1
          %s714 = scalar_select %p713, %s37, 1
          %s715 = scalar_lea.vmem %s17, %s714
        $region96: #{tpu_custom_call.1} parent=27 // pred_fallthru
          _
      $region28: #{tpu_custom_call.1} parent=5 // pred_fallthru
        _
      %p716 = scmp.le.s32.totalorder 1, %s29
      %p717 = scmp.lt.s32.totalorder %s29, 5
      %p718 = pnand %p716, %p717
      %p719 = pneg %p718
      // Predicated region
      $region97: #{tpu_custom_call.1} parent=5 // pred_check
        _
      $region98: #{tpu_custom_call.1} parent=5 // pred_check_branch
        %721 = sbr.rel (%p718) target = $region100
      $region99: #{tpu_custom_call.1} parent=5 // pred_region
        %s722 = ssub.s32 %s29, 1
        %p723 = scmp.lt.s32.totalorder %s38, 1
        %s724 = scalar_select %p723, %s38, 1
        %s725 = smul.addr %s724, 8
        %s726 = scalar_lea.vmem %s0, %s725
        %p727 = pneg %p67
        %p728 = pneg %p64
        %p729 = pneg %p88
        %p730 = pneg %p85
        %p731 = scmp.lt.s32.totalorder %s39, 1
        %s732 = scalar_select %p731, %s39, 1
        %s733 = scalar_lea.vmem %s2, %s732
        %p734 = pneg %p114
        %p735 = pneg %p111
        %p736 = scmp.lt.s32.totalorder %s39, 1
        %s737 = scalar_select %p736, %s39, 1
        %s738 = scalar_lea.vmem %s3, %s737
        %p739 = pneg %p140
        %p740 = pneg %p137
        %p741 = scmp.lt.s32.totalorder %s39, 1
        %s742 = scalar_select %p741, %s39, 1
        %s743 = smul.addr %s742, 4
        %s744 = smul.addr %s743, 4
        %s745 = scalar_lea.vmem %s4, %s744
        %p746 = pneg %p166
        %p747 = pneg %p163
        %p748 = scmp.lt.s32.totalorder %s39, 1
        %s749 = scalar_select %p748, %s39, 1
        %s750 = scalar_lea.vmem %s5, %s749
        %p751 = pneg %p192
        %p752 = pneg %p189
        %p753 = scmp.lt.s32.totalorder %s39, 1
        %s754 = scalar_select %p753, %s39, 1
        %s755 = smul.addr %s754, 4
        %s756 = smul.addr %s755, 4
        %s757 = scalar_lea.vmem %s6, %s756
        %p758 = pneg %p218
        %p759 = pneg %p215
        %p760 = scmp.lt.s32.totalorder %s39, 1
        %s761 = scalar_select %p760, %s39, 1
        %s762 = scalar_lea.vmem %s7, %s761
        %p763 = pneg %p244
        %p764 = pneg %p241
        %p765 = scmp.lt.s32.totalorder %s39, 1
        %s766 = scalar_select %p765, %s39, 1
        %s767 = smul.addr %s766, 4
        %s768 = smul.addr %s767, 4
        %s769 = scalar_lea.vmem %s8, %s768
        %p770 = pneg %p270
        %p771 = pneg %p267
        %p772 = scmp.lt.s32.totalorder %s39, 1
        %s773 = scalar_select %p772, %s39, 1
        %s774 = scalar_lea.vmem %s9, %s773
        %p775 = pneg %p296
        %p776 = pneg %p293
        %p777 = scmp.lt.s32.totalorder %s39, 1
        %s778 = scalar_select %p777, %s39, 1
        %s779 = smul.addr %s778, 4
        %s780 = smul.addr %s779, 4
        %s781 = scalar_lea.vmem %s10, %s780
        %p782 = pneg %p322
        %p783 = pneg %p319
        %p784 = scmp.lt.s32.totalorder %s39, 1
        %s785 = scalar_select %p784, %s39, 1
        %s786 = scalar_lea.vmem %s11, %s785
        %p787 = pneg %p348
        %p788 = pneg %p345
        %p789 = scmp.lt.s32.totalorder %s39, 1
        %s790 = scalar_select %p789, %s39, 1
        %s791 = scalar_lea.vmem %s12, %s790
        %p792 = pneg %p374
        %p793 = pneg %p371
        %p794 = scmp.lt.s32.totalorder %s39, 1
        %s795 = scalar_select %p794, %s39, 1
        %s796 = scalar_lea.vmem %s13, %s795
        %p797 = pneg %p400
        %p798 = pneg %p397
        %p799 = scmp.lt.s32.totalorder %s39, 1
        %s800 = scalar_select %p799, %s39, 1
        %s801 = smul.addr %s800, 8
        %s802 = smul.addr %s801, 4
        %s803 = scalar_lea.vmem %s14, %s802
        %p804 = pneg %p426
        %p805 = pneg %p423
        %p806 = scmp.lt.s32.totalorder %s39, 1
        %s807 = scalar_select %p806, %s39, 1
        %s808 = smul.addr %s807, 2
        %s809 = scalar_lea.vmem %s15, %s808
        %p810 = pneg %p452
        %p811 = pneg %p449
        %p812 = scmp.lt.s32.totalorder %s39, 1
        %s813 = scalar_select %p812, %s39, 1
        %s814 = smul.addr %s813, 32
        %s815 = smul.addr %s814, 4
        %s816 = scalar_lea.vmem %s16, %s815
        %p817 = pneg %p478
        %p818 = pneg %p475
        %p819 = scmp.lt.s32.totalorder %s39, 1
        %s820 = scalar_select %p819, %s39, 1
        %s821 = scalar_lea.vmem %s17, %s820
        %p822 = pneg %p504
        %p823 = pneg %p501
        %p824 = pneg %p525
        %p825 = pneg %p522
        %p826 = pneg %p546
        %p827 = pneg %p543
        %p828 = pneg %p572
        %p829 = pneg %p569
        %s830 = sand.u32 %s559, 1
        %s831 = scalar_lea.sflag [#allocation4], %s830
        %s832 = sand.u32 %s559, 1
        %s833 = smul.addr %s832, 8
        %s834 = scalar_lea.vmem [#allocation3], %s833
        %p835 = scmp.lt.s32.totalorder %s38, 1
        %s836 = scalar_select %p835, %s38, 1
        %s837 = smul.addr %s836, 8
        %s838 = scalar_lea.vmem %s0, %s837
        %p839 = scmp.lt.s32.totalorder %s39, 1
        %s840 = scalar_select %p839, %s39, 1
        %s841 = scalar_lea.vmem %s2, %s840
        %p842 = scmp.lt.s32.totalorder %s39, 1
        %s843 = scalar_select %p842, %s39, 1
        %s844 = scalar_lea.vmem %s3, %s843
        %p845 = scmp.lt.s32.totalorder %s39, 1
        %s846 = scalar_select %p845, %s39, 1
        %s847 = smul.addr %s846, 4
        %s848 = smul.addr %s847, 4
        %s849 = scalar_lea.vmem %s4, %s848
        %p850 = scmp.lt.s32.totalorder %s39, 1
        %s851 = scalar_select %p850, %s39, 1
        %s852 = scalar_lea.vmem %s5, %s851
        %p853 = scmp.lt.s32.totalorder %s39, 1
        %s854 = scalar_select %p853, %s39, 1
        %s855 = smul.addr %s854, 4
        %s856 = smul.addr %s855, 4
        %s857 = scalar_lea.vmem %s6, %s856
        %p858 = scmp.lt.s32.totalorder %s39, 1
        %s859 = scalar_select %p858, %s39, 1
        %s860 = scalar_lea.vmem %s7, %s859
        %p861 = scmp.lt.s32.totalorder %s39, 1
        %s862 = scalar_select %p861, %s39, 1
        %s863 = smul.addr %s862, 4
        %s864 = smul.addr %s863, 4
        %s865 = scalar_lea.vmem %s8, %s864
        %p866 = scmp.lt.s32.totalorder %s39, 1
        %s867 = scalar_select %p866, %s39, 1
        %s868 = scalar_lea.vmem %s9, %s867
        %p869 = scmp.lt.s32.totalorder %s39, 1
        %s870 = scalar_select %p869, %s39, 1
        %s871 = smul.addr %s870, 4
        %s872 = smul.addr %s871, 4
        %s873 = scalar_lea.vmem %s10, %s872
        %p874 = scmp.lt.s32.totalorder %s39, 1
        %s875 = scalar_select %p874, %s39, 1
        %s876 = scalar_lea.vmem %s11, %s875
        %p877 = scmp.lt.s32.totalorder %s39, 1
        %s878 = scalar_select %p877, %s39, 1
        %s879 = scalar_lea.vmem %s12, %s878
        %p880 = scmp.lt.s32.totalorder %s39, 1
        %s881 = scalar_select %p880, %s39, 1
        %s882 = scalar_lea.vmem %s13, %s881
        %p883 = scmp.lt.s32.totalorder %s39, 1
        %s884 = scalar_select %p883, %s39, 1
        %s885 = smul.addr %s884, 8
        %s886 = smul.addr %s885, 4
        %s887 = scalar_lea.vmem %s14, %s886
        %p888 = scmp.lt.s32.totalorder %s39, 1
        %s889 = scalar_select %p888, %s39, 1
        %s890 = smul.addr %s889, 2
        %s891 = scalar_lea.vmem %s15, %s890
        %p892 = scmp.lt.s32.totalorder %s39, 1
        %s893 = scalar_select %p892, %s39, 1
        %s894 = smul.addr %s893, 32
        %s895 = smul.addr %s894, 4
        %s896 = scalar_lea.vmem %s16, %s895
        %p897 = scmp.lt.s32.totalorder %s39, 1
        %s898 = scalar_select %p897, %s39, 1
        %s899 = scalar_lea.vmem %s17, %s898
        %p901 = scmp.eq.s32.totalorder %s39, 0
        // Predicated region
        $region101: #{tpu_custom_call.1} parent=99 // pred_check
          %p902 = pneg %p901
        $region102: #{tpu_custom_call.1} parent=99 // pred_check_branch
          %904 = sbr.rel (%p902) target = $region104
        $region103: #{tpu_custom_call.1} parent=99 // pred_region
          %v905 = vld [vmem:[%s838] sm:$0xff]
          %v906 = vmul.f32 %v905, 5.656854
          %v907 = vld [vmem:[%s1] sm:$0xff]
          %v908 = vadd.f32 %v906, %v907
          %vm909 = vcmask 261120
          %910 = vst.msk [vmem:[#allocation2] sm:$0xff] %vm909, %v908
        $region104: #{tpu_custom_call.1} parent=99 // pred_fallthru
          _
        %v911 = vld [vmem:[#allocation2] sm:$0xff]
        %v912 = vld [vmem:[%s841] sm:$0x1]
        %v913 = vld [vmem:[%s844] sm:$0x1]
        %vm914 = vcmask 261120
        %v915 = vsel %vm914, %v911, 0.0
        %916 = vadd.xlane.f32.xlu0 %v915
        %v917 = vpop.xlane.xlu0 %916
        %v918 = vrcp.pop 32.0
        %v919 = vmul.f32 %v917, %v918
        %v920 = vsub.f32 %v911, %v919
        %v921 = vmul.f32 %v920, %v920
        %v922 = vsel %vm914, %v921, 0.0
        %923 = vadd.xlane.f32.xlu0 %v922
        %v924 = vpop.xlane.xlu0 %923
        %v925 = vmul.f32 %v924, %v918
        %v926 = vadd.f32 %v925, 1e-05
        %v927 = vrsqrt.pop %v926
        %v928 = vmul.f32 %v920, %v927
        %v930 = vlaneseq
        %v931 = vshrl.u32 %v930, 7
        %v932 = vsub.s32 0, %v931
        %v933 = vrot.slane %v912, %v932
        %v935 = vmul.f32 %v928, %v933
        %v937 = vlaneseq
        %v938 = vshrl.u32 %v937, 7
        %v939 = vsub.s32 0, %v938
        %v940 = vrot.slane %v913, %v939
        %v942 = vadd.f32 %v935, %v940
        %v943 = vpack.c.bf16 %v942, %v942
        %v944 = vld [vmem:[%s849] sm:$0xf]
        %v945 = vld [vmem:[%s849 + $0x4] sm:$0xf]
        %v946 = vld [vmem:[%s849 + $0x8] sm:$0xf]
        %v947 = vld [vmem:[%s849 + $0xc] sm:$0xf]
        %v948 = vld [vmem:[%s852] sm:$0x1]
        %v950 = vlaneseq
        %v951 = vshrl.u32 %v950, 7
        %v952 = vsub.s32 0, %v951
        %v953 = vrot.slane %v948, %v952
        %v959 = vunpack.c.l.b16 %v944
        %v960 = vunpack.c.l.b16 %v945
        %v961 = vunpack.c.l.b16 %v946
        %v962 = vunpack.c.l.b16 %v947
        %v963 = vpack.c.b16 %v960, %v959
        %v964 = vpack.c.b16 %v962, %v961
        %v968 = vsel %vm914, %v943, 0
        %970 = vmatprep.subr.bf16.mxu0 0
        %971 = vmatpush1.bf16.msra.mxu0 %v963
        %972 = vmatprep.subr.bf16.mxu0 0
        %973 = vmatpush1.bf16.msra.mxu0 %v964
        %974 = vmatprep.subr.bf16.mxu0 0
        %975 = vmatpush1.bf16.msra.mxu0 0
        %976 = vmatprep.subr.bf16.mxu0 0
        %977 = vmatpush1.bf16.msra.mxu0 0
        %978 = vmatprep.subr.bf16.mxu0 0
        %979 = vmatpush1.bf16.msra.mxu0 0
        %980 = vmatprep.subr.bf16.mxu0 0
        %981 = vmatpush1.bf16.msra.mxu0 0
        %982 = vmatprep.subr.bf16.mxu0 0
        %983 = vmatpush1.bf16.msra.mxu0 0
        %984 = vmatprep.subr.bf16.mxu0 0
        %985 = vmatpush1.bf16.msra.mxu0 0
        %986 = vmatprep.subr.bf16.mxu0 0
        %987 = vmatpush1.bf16.msra.mxu0 0
        %988 = vmatprep.subr.bf16.mxu0 0
        %989 = vmatpush1.bf16.msra.mxu0 0
        %990 = vmatprep.subr.bf16.mxu0 0
        %991 = vmatpush1.bf16.msra.mxu0 0
        %992 = vmatprep.subr.bf16.mxu0 0
        %993 = vmatpush1.bf16.msra.mxu0 0
        %994 = vmatprep.subr.bf16.mxu0 0
        %995 = vmatpush1.bf16.msra.mxu0 0
        %996 = vmatprep.subr.bf16.mxu0 0
        %997 = vmatpush1.bf16.msra.mxu0 0
        %998 = vmatprep.subr.bf16.mxu0 0
        %999 = vmatpush1.bf16.msra.mxu0 0
        %1000 = vmatprep.subr.bf16.mxu0 0
        %1001 = vmatpush1.bf16.msra.mxu0 0
        %1002 = vmatprep.mubr.bf16.mxu0 0
        %1003 = vmatmul.mubr.bf16.gmra.mrb[0].mxu0 %v968
        %v1004 = vpop.f32.mrb[0].mxu0
        %v1005 = vadd.f32 %v953, %v1004
        %v1006 = vpop.f32.mrb[0].mxu0
        %v1007 = vpop.f32.mrb[0].mxu0
        %v1008 = vpop.f32.mrb[0].mxu0
        %1009 = vdwg.mxu0
        %v1010 = vld [vmem:[%s857] sm:$0xf]
        %v1011 = vld [vmem:[%s857 + $0x4] sm:$0xf]
        %v1012 = vld [vmem:[%s857 + $0x8] sm:$0xf]
        %v1013 = vld [vmem:[%s857 + $0xc] sm:$0xf]
        %v1014 = vld [vmem:[%s860] sm:$0x1]
        %v1016 = vlaneseq
        %v1017 = vshrl.u32 %v1016, 7
        %v1018 = vsub.s32 0, %v1017
        %v1019 = vrot.slane %v1014, %v1018
        %v1025 = vunpack.c.l.b16 %v1010
        %v1026 = vunpack.c.l.b16 %v1011
        %v1027 = vunpack.c.l.b16 %v1012
        %v1028 = vunpack.c.l.b16 %v1013
        %v1029 = vpack.c.b16 %v1026, %v1025
        %v1030 = vpack.c.b16 %v1028, %v1027
        %1033 = vmatprep.subr.bf16.mxu0 0
        %1034 = vmatpush1.bf16.msra.mxu0 %v1029
        %1035 = vmatprep.subr.bf16.mxu0 0
        %1036 = vmatpush1.bf16.msra.mxu0 %v1030
        %1037 = vmatprep.subr.bf16.mxu0 0
        %1038 = vmatpush1.bf16.msra.mxu0 0
        %1039 = vmatprep.subr.bf16.mxu0 0
        %1040 = vmatpush1.bf16.msra.mxu0 0
        %1041 = vmatprep.subr.bf16.mxu0 0
        %1042 = vmatpush1.bf16.msra.mxu0 0
        %1043 = vmatprep.subr.bf16.mxu0 0
        %1044 = vmatpush1.bf16.msra.mxu0 0
        %1045 = vmatprep.subr.bf16.mxu0 0
        %1046 = vmatpush1.bf16.msra.mxu0 0
        %1047 = vmatprep.subr.bf16.mxu0 0
        %1048 = vmatpush1.bf16.msra.mxu0 0
        %1049 = vmatprep.subr.bf16.mxu0 0
        %1050 = vmatpush1.bf16.msra.mxu0 0
        %1051 = vmatprep.subr.bf16.mxu0 0
        %1052 = vmatpush1.bf16.msra.mxu0 0
        %1053 = vmatprep.subr.bf16.mxu0 0
        %1054 = vmatpush1.bf16.msra.mxu0 0
        %1055 = vmatprep.subr.bf16.mxu0 0
        %1056 = vmatpush1.bf16.msra.mxu0 0
        %1057 = vmatprep.subr.bf16.mxu0 0
        %1058 = vmatpush1.bf16.msra.mxu0 0
        %1059 = vmatprep.subr.bf16.mxu0 0
        %1060 = vmatpush1.bf16.msra.mxu0 0
        %1061 = vmatprep.subr.bf16.mxu0 0
        %1062 = vmatpush1.bf16.msra.mxu0 0
        %1063 = vmatprep.subr.bf16.mxu0 0
        %1064 = vmatpush1.bf16.msra.mxu0 0
        %1065 = vmatprep.mubr.bf16.mxu0 0
        %1066 = vmatmul.mubr.bf16.gmra.mrb[0].mxu0 %v968
        %v1067 = vpop.f32.mrb[0].mxu0
        %v1068 = vadd.f32 %v1019, %v1067
        %v1069 = vpop.f32.mrb[0].mxu0
        %v1070 = vpop.f32.mrb[0].mxu0
        %v1071 = vpop.f32.mrb[0].mxu0
        %1072 = vdwg.mxu0
        %v1073 = vld [vmem:[%s865] sm:$0xf]
        %v1074 = vld [vmem:[%s865 + $0x4] sm:$0xf]
        %v1075 = vld [vmem:[%s865 + $0x8] sm:$0xf]
        %v1076 = vld [vmem:[%s865 + $0xc] sm:$0xf]
        %v1077 = vld [vmem:[%s868] sm:$0x1]
        %v1079 = vlaneseq
        %v1080 = vshrl.u32 %v1079, 7
        %v1081 = vsub.s32 0, %v1080
        %v1082 = vrot.slane %v1077, %v1081
        %v1088 = vunpack.c.l.b16 %v1073
        %v1089 = vunpack.c.l.b16 %v1074
        %v1090 = vunpack.c.l.b16 %v1075
        %v1091 = vunpack.c.l.b16 %v1076
        %v1092 = vpack.c.b16 %v1089, %v1088
        %v1093 = vpack.c.b16 %v1091, %v1090
        %1096 = vmatprep.subr.bf16.mxu0 0
        %1097 = vmatpush1.bf16.msra.mxu0 %v1092
        %1098 = vmatprep.subr.bf16.mxu0 0
        %1099 = vmatpush1.bf16.msra.mxu0 %v1093
        %1100 = vmatprep.subr.bf16.mxu0 0
        %1101 = vmatpush1.bf16.msra.mxu0 0
        %1102 = vmatprep.subr.bf16.mxu0 0
        %1103 = vmatpush1.bf16.msra.mxu0 0
        %1104 = vmatprep.subr.bf16.mxu0 0
        %1105 = vmatpush1.bf16.msra.mxu0 0
        %1106 = vmatprep.subr.bf16.mxu0 0
        %1107 = vmatpush1.bf16.msra.mxu0 0
        %1108 = vmatprep.subr.bf16.mxu0 0
        %1109 = vmatpush1.bf16.msra.mxu0 0
        %1110 = vmatprep.subr.bf16.mxu0 0
        %1111 = vmatpush1.bf16.msra.mxu0 0
        %1112 = vmatprep.subr.bf16.mxu0 0
        %1113 = vmatpush1.bf16.msra.mxu0 0
        %1114 = vmatprep.subr.bf16.mxu0 0
        %1115 = vmatpush1.bf16.msra.mxu0 0
        %1116 = vmatprep.subr.bf16.mxu0 0
        %1117 = vmatpush1.bf16.msra.mxu0 0
        %1118 = vmatprep.subr.bf16.mxu0 0
        %1119 = vmatpush1.bf16.msra.mxu0 0
        %1120 = vmatprep.subr.bf16.mxu0 0
        %1121 = vmatpush1.bf16.msra.mxu0 0
        %1122 = vmatprep.subr.bf16.mxu0 0
        %1123 = vmatpush1.bf16.msra.mxu0 0
        %1124 = vmatprep.subr.bf16.mxu0 0
        %1125 = vmatpush1.bf16.msra.mxu0 0
        %1126 = vmatprep.subr.bf16.mxu0 0
        %1127 = vmatpush1.bf16.msra.mxu0 0
        %1128 = vmatprep.mubr.bf16.mxu0 0
        %1129 = vmatmul.mubr.bf16.gmra.mrb[0].mxu0 %v968
        %v1130 = vpop.f32.mrb[0].mxu0
        %v1131 = vadd.f32 %v1082, %v1130
        %v1132 = vpop.f32.mrb[0].mxu0
        %v1133 = vpop.f32.mrb[0].mxu0
        %v1134 = vpop.f32.mrb[0].mxu0
        %1135 = vdwg.mxu0
        %1137 = vrot.lane.b32.xlu0 %v1005, 120
        %v1138 = vpop.permute.xlu0 %1137
        %1140 = vrot.lane.b32.xlu0 %v1005, 112
        %v1141 = vpop.permute.xlu0 %1140
        %1143 = vrot.lane.b32.xlu0 %v1005, 104
        %v1144 = vpop.permute.xlu0 %1143
        %v1146 = vcombine.low %v1005, %v1141
        %v1147 = vcombine.high %v1005, %v1141
        %v1149 = vunpack.c.l.s4 1983009808
        %v1150 = vunpack.c.0.s8 %v1149
        %v1151 = vlaneseq
        %v1152 = vshrl.u32 %v1151, 7
        %v1153 = vsub.s32 %v1150, %v1152
        %v1154 = vrot.slane %v1146, %v1153
        %v1156 = vunpack.c.l.s4 1983009808
        %v1157 = vunpack.c.0.s8 %v1156
        %v1158 = vlaneseq
        %v1159 = vshrl.u32 %v1158, 7
        %v1160 = vsub.s32 %v1157, %v1159
        %v1161 = vrot.slane %v1147, %v1160
        %v1162 = vcombine.low %v1138, %v1144
        %v1163 = vcombine.high %v1138, %v1144
        %v1165 = vunpack.c.l.s4 1983009808
        %v1166 = vunpack.c.0.s8 %v1165
        %v1167 = vlaneseq
        %v1168 = vshrl.u32 %v1167, 7
        %v1169 = vsub.s32 %v1166, %v1168
        %v1170 = vrot.slane %v1162, %v1169
        %v1172 = vunpack.c.l.s4 1983009808
        %v1173 = vunpack.c.0.s8 %v1172
        %v1174 = vlaneseq
        %v1175 = vshrl.u32 %v1174, 7
        %v1176 = vsub.s32 %v1173, %v1175
        %v1177 = vrot.slane %v1163, %v1176
        %v1178 = vcombine.low %v1154, %v1170
        %v1179 = vcombine.high %v1154, %v1170
        %v1181 = vunpack.c.l.s4 1934713408
        %v1182 = vunpack.c.0.s8 %v1181
        %v1183 = vlaneseq
        %v1184 = vshrl.u32 %v1183, 7
        %v1185 = vsub.s32 %v1182, %v1184
        %v1186 = vrot.slane %v1178, %v1185
        %v1188 = vunpack.c.l.s4 1934713408
        %v1189 = vunpack.c.0.s8 %v1188
        %v1190 = vlaneseq
        %v1191 = vshrl.u32 %v1190, 7
        %v1192 = vsub.s32 %v1189, %v1191
        %v1193 = vrot.slane %v1179, %v1192
        %v1194 = vcombine.low %v1161, %v1177
        %v1195 = vcombine.high %v1161, %v1177
        %v1197 = vunpack.c.l.s4 1934713408
        %v1198 = vunpack.c.0.s8 %v1197
        %v1199 = vlaneseq
        %v1200 = vshrl.u32 %v1199, 7
        %v1201 = vsub.s32 %v1198, %v1200
        %v1202 = vrot.slane %v1194, %v1201
        %v1204 = vunpack.c.l.s4 1934713408
        %v1205 = vunpack.c.0.s8 %v1204
        %v1206 = vlaneseq
        %v1207 = vshrl.u32 %v1206, 7
        %v1208 = vsub.s32 %v1205, %v1207
        %v1209 = vrot.slane %v1195, %v1208
        %v1210 = vcombine.high %v1186, 0.0
        %v1211 = vcombine.high %v1193, 0.0
        %v1212 = vcombine.high %v1202, 0.0
        %v1213 = vcombine.high %v1209, 0.0
        %v1214 = vcombine.low %v1186, %v1193
        %v1216 = vunpack.c.l.s4 1983009808
        %v1217 = vunpack.c.0.s8 %v1216
        %v1218 = vlaneseq
        %v1219 = vshrl.u32 %v1218, 7
        %v1220 = vsub.s32 %v1217, %v1219
        %v1221 = vrot.slane %v1214, %v1220
        %v1222 = vcombine.low %v1210, %v1211
        %v1224 = vunpack.c.l.s4 1983009808
        %v1225 = vunpack.c.0.s8 %v1224
        %v1226 = vlaneseq
        %v1227 = vshrl.u32 %v1226, 7
        %v1228 = vsub.s32 %v1225, %v1227
        %v1229 = vrot.slane %v1222, %v1228
        %v1230 = vcombine.low %v1202, %v1209
        %v1232 = vunpack.c.l.s4 1983009808
        %v1233 = vunpack.c.0.s8 %v1232
        %v1234 = vlaneseq
        %v1235 = vshrl.u32 %v1234, 7
        %v1236 = vsub.s32 %v1233, %v1235
        %v1237 = vrot.slane %v1230, %v1236
        %v1238 = vcombine.low %v1212, %v1213
        %v1240 = vunpack.c.l.s4 1983009808
        %v1241 = vunpack.c.0.s8 %v1240
        %v1242 = vlaneseq
        %v1243 = vshrl.u32 %v1242, 7
        %v1244 = vsub.s32 %v1241, %v1243
        %v1245 = vrot.slane %v1238, %v1244
        %v1246 = vcombine.low %v1221, %v1229
        %v1247 = vcombine.high %v1221, %v1229
        %v1249 = vunpack.c.l.s4 1934713408
        %v1250 = vunpack.c.0.s8 %v1249
        %v1251 = vlaneseq
        %v1252 = vshrl.u32 %v1251, 7
        %v1253 = vsub.s32 %v1250, %v1252
        %v1254 = vrot.slane %v1246, %v1253
        %v1256 = vunpack.c.l.s4 1934713408
        %v1257 = vunpack.c.0.s8 %v1256
        %v1258 = vlaneseq
        %v1259 = vshrl.u32 %v1258, 7
        %v1260 = vsub.s32 %v1257, %v1259
        %v1261 = vrot.slane %v1247, %v1260
        %v1262 = vcombine.low %v1237, %v1245
        %v1263 = vcombine.high %v1237, %v1245
        %v1265 = vunpack.c.l.s4 1934713408
        %v1266 = vunpack.c.0.s8 %v1265
        %v1267 = vlaneseq
        %v1268 = vshrl.u32 %v1267, 7
        %v1269 = vsub.s32 %v1266, %v1268
        %v1270 = vrot.slane %v1262, %v1269
        %v1272 = vunpack.c.l.s4 1934713408
        %v1273 = vunpack.c.0.s8 %v1272
        %v1274 = vlaneseq
        %v1275 = vshrl.u32 %v1274, 7
        %v1276 = vsub.s32 %v1273, %v1275
        %v1277 = vrot.slane %v1263, %v1276
        %v1278 = vcombine.low %v1254, %v1270
        %v1279 = vcombine.high %v1254, %v1270
        %v1280 = vcombine.low %v1261, %v1277
        %v1281 = vcombine.high %v1261, %v1277
        %v1282 = vpack.c.bf16 %v1278, %v1278
        %v1283 = vpack.c.bf16 %v1279, %v1279
        %v1284 = vpack.c.bf16 %v1280, %v1280
        %v1285 = vpack.c.bf16 %v1281, %v1281
        %1287 = vrot.lane.b32.xlu0 %v1068, 120
        %v1288 = vpop.permute.xlu0 %1287
        %1290 = vrot.lane.b32.xlu0 %v1068, 112
        %v1291 = vpop.permute.xlu0 %1290
        %1293 = vrot.lane.b32.xlu0 %v1068, 104
        %v1294 = vpop.permute.xlu0 %1293
        %v1296 = vcombine.low %v1068, %v1291
        %v1297 = vcombine.high %v1068, %v1291
        %v1299 = vunpack.c.l.s4 1983009808
        %v1300 = vunpack.c.0.s8 %v1299
        %v1301 = vlaneseq
        %v1302 = vshrl.u32 %v1301, 7
        %v1303 = vsub.s32 %v1300, %v1302
        %v1304 = vrot.slane %v1296, %v1303
        %v1306 = vunpack.c.l.s4 1983009808
        %v1307 = vunpack.c.0.s8 %v1306
        %v1308 = vlaneseq
        %v1309 = vshrl.u32 %v1308, 7
        %v1310 = vsub.s32 %v1307, %v1309
        %v1311 = vrot.slane %v1297, %v1310
        %v1312 = vcombine.low %v1288, %v1294
        %v1313 = vcombine.high %v1288, %v1294
        %v1315 = vunpack.c.l.s4 1983009808
        %v1316 = vunpack.c.0.s8 %v1315
        %v1317 = vlaneseq
        %v1318 = vshrl.u32 %v1317, 7
        %v1319 = vsub.s32 %v1316, %v1318
        %v1320 = vrot.slane %v1312, %v1319
        %v1322 = vunpack.c.l.s4 1983009808
        %v1323 = vunpack.c.0.s8 %v1322
        %v1324 = vlaneseq
        %v1325 = vshrl.u32 %v1324, 7
        %v1326 = vsub.s32 %v1323, %v1325
        %v1327 = vrot.slane %v1313, %v1326
        %v1328 = vcombine.low %v1304, %v1320
        %v1329 = vcombine.high %v1304, %v1320
        %v1331 = vunpack.c.l.s4 1934713408
        %v1332 = vunpack.c.0.s8 %v1331
        %v1333 = vlaneseq
        %v1334 = vshrl.u32 %v1333, 7
        %v1335 = vsub.s32 %v1332, %v1334
        %v1336 = vrot.slane %v1328, %v1335
        %v1338 = vunpack.c.l.s4 1934713408
        %v1339 = vunpack.c.0.s8 %v1338
        %v1340 = vlaneseq
        %v1341 = vshrl.u32 %v1340, 7
        %v1342 = vsub.s32 %v1339, %v1341
        %v1343 = vrot.slane %v1329, %v1342
        %v1344 = vcombine.low %v1311, %v1327
        %v1345 = vcombine.high %v1311, %v1327
        %v1347 = vunpack.c.l.s4 1934713408
        %v1348 = vunpack.c.0.s8 %v1347
        %v1349 = vlaneseq
        %v1350 = vshrl.u32 %v1349, 7
        %v1351 = vsub.s32 %v1348, %v1350
        %v1352 = vrot.slane %v1344, %v1351
        %v1354 = vunpack.c.l.s4 1934713408
        %v1355 = vunpack.c.0.s8 %v1354
        %v1356 = vlaneseq
        %v1357 = vshrl.u32 %v1356, 7
        %v1358 = vsub.s32 %v1355, %v1357
        %v1359 = vrot.slane %v1345, %v1358
        %v1360 = vcombine.high %v1336, 0.0
        %v1361 = vcombine.high %v1343, 0.0
        %v1362 = vcombine.high %v1352, 0.0
        %v1363 = vcombine.high %v1359, 0.0
        %v1364 = vcombine.low %v1336, %v1343
        %v1366 = vunpack.c.l.s4 1983009808
        %v1367 = vunpack.c.0.s8 %v1366
        %v1368 = vlaneseq
        %v1369 = vshrl.u32 %v1368, 7
        %v1370 = vsub.s32 %v1367, %v1369
        %v1371 = vrot.slane %v1364, %v1370
        %v1372 = vcombine.low %v1360, %v1361
        %v1374 = vunpack.c.l.s4 1983009808
        %v1375 = vunpack.c.0.s8 %v1374
        %v1376 = vlaneseq
        %v1377 = vshrl.u32 %v1376, 7
        %v1378 = vsub.s32 %v1375, %v1377
        %v1379 = vrot.slane %v1372, %v1378
        %v1380 = vcombine.low %v1352, %v1359
        %v1382 = vunpack.c.l.s4 1983009808
        %v1383 = vunpack.c.0.s8 %v1382
        %v1384 = vlaneseq
        %v1385 = vshrl.u32 %v1384, 7
        %v1386 = vsub.s32 %v1383, %v1385
        %v1387 = vrot.slane %v1380, %v1386
        %v1388 = vcombine.low %v1362, %v1363
        %v1390 = vunpack.c.l.s4 1983009808
        %v1391 = vunpack.c.0.s8 %v1390
        %v1392 = vlaneseq
        %v1393 = vshrl.u32 %v1392, 7
        %v1394 = vsub.s32 %v1391, %v1393
        %v1395 = vrot.slane %v1388, %v1394
        %v1396 = vcombine.low %v1371, %v1379
        %v1397 = vcombine.high %v1371, %v1379
        %v1399 = vunpack.c.l.s4 1934713408
        %v1400 = vunpack.c.0.s8 %v1399
        %v1401 = vlaneseq
        %v1402 = vshrl.u32 %v1401, 7
        %v1403 = vsub.s32 %v1400, %v1402
        %v1404 = vrot.slane %v1396, %v1403
        %v1406 = vunpack.c.l.s4 1934713408
        %v1407 = vunpack.c.0.s8 %v1406
        %v1408 = vlaneseq
        %v1409 = vshrl.u32 %v1408, 7
        %v1410 = vsub.s32 %v1407, %v1409
        %v1411 = vrot.slane %v1397, %v1410
        %v1412 = vcombine.low %v1387, %v1395
        %v1413 = vcombine.high %v1387, %v1395
        %v1415 = vunpack.c.l.s4 1934713408
        %v1416 = vunpack.c.0.s8 %v1415
        %v1417 = vlaneseq
        %v1418 = vshrl.u32 %v1417, 7
        %v1419 = vsub.s32 %v1416, %v1418
        %v1420 = vrot.slane %v1412, %v1419
        %v1422 = vunpack.c.l.s4 1934713408
        %v1423 = vunpack.c.0.s8 %v1422
        %v1424 = vlaneseq
        %v1425 = vshrl.u32 %v1424, 7
        %v1426 = vsub.s32 %v1423, %v1425
        %v1427 = vrot.slane %v1413, %v1426
        %v1428 = vcombine.low %v1404, %v1420
        %v1429 = vcombine.high %v1404, %v1420
        %v1430 = vcombine.low %v1411, %v1427
        %v1431 = vcombine.high %v1411, %v1427
        %v1432 = vpack.c.bf16 %v1428, %v1428
        %v1433 = vpack.c.bf16 %v1429, %v1429
        %v1434 = vpack.c.bf16 %v1430, %v1430
        %v1435 = vpack.c.bf16 %v1431, %v1431
        %1437 = vrot.lane.b32.xlu0 %v1131, 120
        %v1438 = vpop.permute.xlu0 %1437
        %1440 = vrot.lane.b32.xlu0 %v1131, 112
        %v1441 = vpop.permute.xlu0 %1440
        %1443 = vrot.lane.b32.xlu0 %v1131, 104
        %v1444 = vpop.permute.xlu0 %1443
        %v1446 = vcombine.low %v1131, %v1441
        %v1447 = vcombine.high %v1131, %v1441
        %v1449 = vunpack.c.l.s4 1983009808
        %v1450 = vunpack.c.0.s8 %v1449
        %v1451 = vlaneseq
        %v1452 = vshrl.u32 %v1451, 7
        %v1453 = vsub.s32 %v1450, %v1452
        %v1454 = vrot.slane %v1446, %v1453
        %v1456 = vunpack.c.l.s4 1983009808
        %v1457 = vunpack.c.0.s8 %v1456
        %v1458 = vlaneseq
        %v1459 = vshrl.u32 %v1458, 7
        %v1460 = vsub.s32 %v1457, %v1459
        %v1461 = vrot.slane %v1447, %v1460
        %v1462 = vcombine.low %v1438, %v1444
        %v1463 = vcombine.high %v1438, %v1444
        %v1465 = vunpack.c.l.s4 1983009808
        %v1466 = vunpack.c.0.s8 %v1465
        %v1467 = vlaneseq
        %v1468 = vshrl.u32 %v1467, 7
        %v1469 = vsub.s32 %v1466, %v1468
        %v1470 = vrot.slane %v1462, %v1469
        %v1472 = vunpack.c.l.s4 1983009808
        %v1473 = vunpack.c.0.s8 %v1472
        %v1474 = vlaneseq
        %v1475 = vshrl.u32 %v1474, 7
        %v1476 = vsub.s32 %v1473, %v1475
        %v1477 = vrot.slane %v1463, %v1476
        %v1478 = vcombine.low %v1454, %v1470
        %v1479 = vcombine.high %v1454, %v1470
        %v1481 = vunpack.c.l.s4 1934713408
        %v1482 = vunpack.c.0.s8 %v1481
        %v1483 = vlaneseq
        %v1484 = vshrl.u32 %v1483, 7
        %v1485 = vsub.s32 %v1482, %v1484
        %v1486 = vrot.slane %v1478, %v1485
        %v1488 = vunpack.c.l.s4 1934713408
        %v1489 = vunpack.c.0.s8 %v1488
        %v1490 = vlaneseq
        %v1491 = vshrl.u32 %v1490, 7
        %v1492 = vsub.s32 %v1489, %v1491
        %v1493 = vrot.slane %v1479, %v1492
        %v1494 = vcombine.low %v1461, %v1477
        %v1495 = vcombine.high %v1461, %v1477
        %v1497 = vunpack.c.l.s4 1934713408
        %v1498 = vunpack.c.0.s8 %v1497
        %v1499 = vlaneseq
        %v1500 = vshrl.u32 %v1499, 7
        %v1501 = vsub.s32 %v1498, %v1500
        %v1502 = vrot.slane %v1494, %v1501
        %v1504 = vunpack.c.l.s4 1934713408
        %v1505 = vunpack.c.0.s8 %v1504
        %v1506 = vlaneseq
        %v1507 = vshrl.u32 %v1506, 7
        %v1508 = vsub.s32 %v1505, %v1507
        %v1509 = vrot.slane %v1495, %v1508
        %v1510 = vcombine.high %v1486, 0.0
        %v1511 = vcombine.high %v1493, 0.0
        %v1512 = vcombine.high %v1502, 0.0
        %v1513 = vcombine.high %v1509, 0.0
        %v1514 = vcombine.low %v1486, %v1493
        %v1516 = vunpack.c.l.s4 1983009808
        %v1517 = vunpack.c.0.s8 %v1516
        %v1518 = vlaneseq
        %v1519 = vshrl.u32 %v1518, 7
        %v1520 = vsub.s32 %v1517, %v1519
        %v1521 = vrot.slane %v1514, %v1520
        %v1522 = vcombine.low %v1510, %v1511
        %v1524 = vunpack.c.l.s4 1983009808
        %v1525 = vunpack.c.0.s8 %v1524
        %v1526 = vlaneseq
        %v1527 = vshrl.u32 %v1526, 7
        %v1528 = vsub.s32 %v1525, %v1527
        %v1529 = vrot.slane %v1522, %v1528
        %v1530 = vcombine.low %v1502, %v1509
        %v1532 = vunpack.c.l.s4 1983009808
        %v1533 = vunpack.c.0.s8 %v1532
        %v1534 = vlaneseq
        %v1535 = vshrl.u32 %v1534, 7
        %v1536 = vsub.s32 %v1533, %v1535
        %v1537 = vrot.slane %v1530, %v1536
        %v1538 = vcombine.low %v1512, %v1513
        %v1540 = vunpack.c.l.s4 1983009808
        %v1541 = vunpack.c.0.s8 %v1540
        %v1542 = vlaneseq
        %v1543 = vshrl.u32 %v1542, 7
        %v1544 = vsub.s32 %v1541, %v1543
        %v1545 = vrot.slane %v1538, %v1544
        %v1546 = vcombine.low %v1521, %v1529
        %v1547 = vcombine.high %v1521, %v1529
        %v1549 = vunpack.c.l.s4 1934713408
        %v1550 = vunpack.c.0.s8 %v1549
        %v1551 = vlaneseq
        %v1552 = vshrl.u32 %v1551, 7
        %v1553 = vsub.s32 %v1550, %v1552
        %v1554 = vrot.slane %v1546, %v1553
        %v1556 = vunpack.c.l.s4 1934713408
        %v1557 = vunpack.c.0.s8 %v1556
        %v1558 = vlaneseq
        %v1559 = vshrl.u32 %v1558, 7
        %v1560 = vsub.s32 %v1557, %v1559
        %v1561 = vrot.slane %v1547, %v1560
        %v1562 = vcombine.low %v1537, %v1545
        %v1563 = vcombine.high %v1537, %v1545
        %v1565 = vunpack.c.l.s4 1934713408
        %v1566 = vunpack.c.0.s8 %v1565
        %v1567 = vlaneseq
        %v1568 = vshrl.u32 %v1567, 7
        %v1569 = vsub.s32 %v1566, %v1568
        %v1570 = vrot.slane %v1562, %v1569
        %v1572 = vunpack.c.l.s4 1934713408
        %v1573 = vunpack.c.0.s8 %v1572
        %v1574 = vlaneseq
        %v1575 = vshrl.u32 %v1574, 7
        %v1576 = vsub.s32 %v1573, %v1575
        %v1577 = vrot.slane %v1563, %v1576
        %v1578 = vcombine.low %v1554, %v1570
        %v1579 = vcombine.high %v1554, %v1570
        %v1580 = vcombine.low %v1561, %v1577
        %v1581 = vcombine.high %v1561, %v1577
        %v1582 = vpack.c.bf16 %v1578, %v1578
        %v1583 = vpack.c.bf16 %v1579, %v1579
        %v1584 = vpack.c.bf16 %v1580, %v1580
        %v1585 = vpack.c.bf16 %v1581, %v1581
        %vm1586 = vcmask 64512
        %v1588 = vsel %vm1586, %v1282, 0
        %v1591 = vsel %vm1586, %v1432, 0
        %1593 = vmatprep.subr.bf16.mxu0 0
        %1594 = vmatpush1.bf16.xpose.msra.mxu0 %v1591
        %1595 = vmatprep.subr.bf16.mxu0 0
        %1596 = vmatpush1.bf16.xpose.msra.mxu0 0
        %1597 = vmatprep.subr.bf16.mxu0 0
        %1598 = vmatpush1.bf16.xpose.msra.mxu0 0
        %1599 = vmatprep.subr.bf16.mxu0 0
        %1600 = vmatpush1.bf16.xpose.msra.mxu0 0
        %1601 = vmatprep.subr.bf16.mxu0 0
        %1602 = vmatpush1.bf16.xpose.msra.mxu0 0
        %1603 = vmatprep.subr.bf16.mxu0 0
        %1604 = vmatpush1.bf16.xpose.msra.mxu0 0
        %1605 = vmatprep.subr.bf16.mxu0 0
        %1606 = vmatpush1.bf16.xpose.msra.mxu0 0
        %1607 = vmatprep.subr.bf16.mxu0 0
        %1608 = vmatpush1.bf16.xpose.msra.mxu0 0
        %1609 = vmatprep.subr.bf16.mxu0 0
        %1610 = vmatpush1.bf16.xpose.msra.mxu0 0
        %1611 = vmatprep.subr.bf16.mxu0 0
        %1612 = vmatpush1.bf16.xpose.msra.mxu0 0
        %1613 = vmatprep.subr.bf16.mxu0 0
        %1614 = vmatpush1.bf16.xpose.msra.mxu0 0
        %1615 = vmatprep.subr.bf16.mxu0 0
        %1616 = vmatpush1.bf16.xpose.msra.mxu0 0
        %1617 = vmatprep.subr.bf16.mxu0 0
        %1618 = vmatpush1.bf16.xpose.msra.mxu0 0
        %1619 = vmatprep.subr.bf16.mxu0 0
        %1620 = vmatpush1.bf16.xpose.msra.mxu0 0
        %1621 = vmatprep.subr.bf16.mxu0 0
        %1622 = vmatpush1.bf16.xpose.msra.mxu0 0
        %1623 = vmatprep.subr.bf16.mxu0 0
        %1624 = vmatpush1.bf16.xpose.msra.mxu0 0
        %1625 = vmatprep.mubr.bf16.mxu0 0
        %1626 = vmatmul.mubr.bf16.gmra.mrb[0].mxu0 %v1588
        %v1627 = vpop.f32.mrb[0].mxu0
        %v1628 = vadd.f32 0.0, %v1627
        %v1629 = vpop.f32.mrb[0].mxu0
        %v1630 = vpop.f32.mrb[0].mxu0
        %v1631 = vpop.f32.mrb[0].mxu0
        %1632 = vdwg.mxu0
        %v1634 = vsel %vm1586, %v1283, 0
        %v1637 = vsel %vm1586, %v1433, 0
        %1639 = vmatprep.subr.bf16.mxu0 0
        %1640 = vmatpush1.bf16.xpose.msra.mxu0 %v1637
        %1641 = vmatprep.subr.bf16.mxu0 0
        %1642 = vmatpush1.bf16.xpose.msra.mxu0 0
        %1643 = vmatprep.subr.bf16.mxu0 0
        %1644 = vmatpush1.bf16.xpose.msra.mxu0 0
        %1645 = vmatprep.subr.bf16.mxu0 0
        %1646 = vmatpush1.bf16.xpose.msra.mxu0 0
        %1647 = vmatprep.subr.bf16.mxu0 0
        %1648 = vmatpush1.bf16.xpose.msra.mxu0 0
        %1649 = vmatprep.subr.bf16.mxu0 0
        %1650 = vmatpush1.bf16.xpose.msra.mxu0 0
        %1651 = vmatprep.subr.bf16.mxu0 0
        %1652 = vmatpush1.bf16.xpose.msra.mxu0 0
        %1653 = vmatprep.subr.bf16.mxu0 0
        %1654 = vmatpush1.bf16.xpose.msra.mxu0 0
        %1655 = vmatprep.subr.bf16.mxu0 0
        %1656 = vmatpush1.bf16.xpose.msra.mxu0 0
        %1657 = vmatprep.subr.bf16.mxu0 0
        %1658 = vmatpush1.bf16.xpose.msra.mxu0 0
        %1659 = vmatprep.subr.bf16.mxu0 0
        %1660 = vmatpush1.bf16.xpose.msra.mxu0 0
        %1661 = vmatprep.subr.bf16.mxu0 0
        %1662 = vmatpush1.bf16.xpose.msra.mxu0 0
        %1663 = vmatprep.subr.bf16.mxu0 0
        %1664 = vmatpush1.bf16.xpose.msra.mxu0 0
        %1665 = vmatprep.subr.bf16.mxu0 0
        %1666 = vmatpush1.bf16.xpose.msra.mxu0 0
        %1667 = vmatprep.subr.bf16.mxu0 0
        %1668 = vmatpush1.bf16.xpose.msra.mxu0 0
        %1669 = vmatprep.subr.bf16.mxu0 0
        %1670 = vmatpush1.bf16.xpose.msra.mxu0 0
        %1671 = vmatprep.mubr.bf16.mxu0 0
        %1672 = vmatmul.mubr.bf16.gmra.mrb[0].mxu0 %v1634
        %v1673 = vpop.f32.mrb[0].mxu0
        %v1674 = vadd.f32 0.0, %v1673
        %v1675 = vpop.f32.mrb[0].mxu0
        %v1676 = vpop.f32.mrb[0].mxu0
        %v1677 = vpop.f32.mrb[0].mxu0
        %1678 = vdwg.mxu0
        %v1680 = vsel %vm1586, %v1284, 0
        %v1683 = vsel %vm1586, %v1434, 0
        %1685 = vmatprep.subr.bf16.mxu0 0
        %1686 = vmatpush1.bf16.xpose.msra.mxu0 %v1683
        %1687 = vmatprep.subr.bf16.mxu0 0
        %1688 = vmatpush1.bf16.xpose.msra.mxu0 0
        %1689 = vmatprep.subr.bf16.mxu0 0
        %1690 = vmatpush1.bf16.xpose.msra.mxu0 0
        %1691 = vmatprep.subr.bf16.mxu0 0
        %1692 = vmatpush1.bf16.xpose.msra.mxu0 0
        %1693 = vmatprep.subr.bf16.mxu0 0
        %1694 = vmatpush1.bf16.xpose.msra.mxu0 0
        %1695 = vmatprep.subr.bf16.mxu0 0
        %1696 = vmatpush1.bf16.xpose.msra.mxu0 0
        %1697 = vmatprep.subr.bf16.mxu0 0
        %1698 = vmatpush1.bf16.xpose.msra.mxu0 0
        %1699 = vmatprep.subr.bf16.mxu0 0
        %1700 = vmatpush1.bf16.xpose.msra.mxu0 0
        %1701 = vmatprep.subr.bf16.mxu0 0
        %1702 = vmatpush1.bf16.xpose.msra.mxu0 0
        %1703 = vmatprep.subr.bf16.mxu0 0
        %1704 = vmatpush1.bf16.xpose.msra.mxu0 0
        %1705 = vmatprep.subr.bf16.mxu0 0
        %1706 = vmatpush1.bf16.xpose.msra.mxu0 0
        %1707 = vmatprep.subr.bf16.mxu0 0
        %1708 = vmatpush1.bf16.xpose.msra.mxu0 0
        %1709 = vmatprep.subr.bf16.mxu0 0
        %1710 = vmatpush1.bf16.xpose.msra.mxu0 0
        %1711 = vmatprep.subr.bf16.mxu0 0
        %1712 = vmatpush1.bf16.xpose.msra.mxu0 0
        %1713 = vmatprep.subr.bf16.mxu0 0
        %1714 = vmatpush1.bf16.xpose.msra.mxu0 0
        %1715 = vmatprep.subr.bf16.mxu0 0
        %1716 = vmatpush1.bf16.xpose.msra.mxu0 0
        %1717 = vmatprep.mubr.bf16.mxu0 0
        %1718 = vmatmul.mubr.bf16.gmra.mrb[0].mxu0 %v1680
        %v1719 = vpop.f32.mrb[0].mxu0
        %v1720 = vadd.f32 0.0, %v1719
        %v1721 = vpop.f32.mrb[0].mxu0
        %v1722 = vpop.f32.mrb[0].mxu0
        %v1723 = vpop.f32.mrb[0].mxu0
        %1724 = vdwg.mxu0
        %v1726 = vsel %vm1586, %v1285, 0
        %v1729 = vsel %vm1586, %v1435, 0
        %1731 = vmatprep.subr.bf16.mxu0 0
        %1732 = vmatpush1.bf16.xpose.msra.mxu0 %v1729
        %1733 = vmatprep.subr.bf16.mxu0 0
        %1734 = vmatpush1.bf16.xpose.msra.mxu0 0
        %1735 = vmatprep.subr.bf16.mxu0 0
        %1736 = vmatpush1.bf16.xpose.msra.mxu0 0
        %1737 = vmatprep.subr.bf16.mxu0 0
        %1738 = vmatpush1.bf16.xpose.msra.mxu0 0
        %1739 = vmatprep.subr.bf16.mxu0 0
        %1740 = vmatpush1.bf16.xpose.msra.mxu0 0
        %1741 = vmatprep.subr.bf16.mxu0 0
        %1742 = vmatpush1.bf16.xpose.msra.mxu0 0
        %1743 = vmatprep.subr.bf16.mxu0 0
        %1744 = vmatpush1.bf16.xpose.msra.mxu0 0
        %1745 = vmatprep.subr.bf16.mxu0 0
        %1746 = vmatpush1.bf16.xpose.msra.mxu0 0
        %1747 = vmatprep.subr.bf16.mxu0 0
        %1748 = vmatpush1.bf16.xpose.msra.mxu0 0
        %1749 = vmatprep.subr.bf16.mxu0 0
        %1750 = vmatpush1.bf16.xpose.msra.mxu0 0
        %1751 = vmatprep.subr.bf16.mxu0 0
        %1752 = vmatpush1.bf16.xpose.msra.mxu0 0
        %1753 = vmatprep.subr.bf16.mxu0 0
        %1754 = vmatpush1.bf16.xpose.msra.mxu0 0
        %1755 = vmatprep.subr.bf16.mxu0 0
        %1756 = vmatpush1.bf16.xpose.msra.mxu0 0
        %1757 = vmatprep.subr.bf16.mxu0 0
        %1758 = vmatpush1.bf16.xpose.msra.mxu0 0
        %1759 = vmatprep.subr.bf16.mxu0 0
        %1760 = vmatpush1.bf16.xpose.msra.mxu0 0
        %1761 = vmatprep.subr.bf16.mxu0 0
        %1762 = vmatpush1.bf16.xpose.msra.mxu0 0
        %1763 = vmatprep.mubr.bf16.mxu0 0
        %1764 = vmatmul.mubr.bf16.gmra.mrb[0].mxu0 %v1726
        %v1765 = vpop.f32.mrb[0].mxu0
        %v1766 = vadd.f32 0.0, %v1765
        %v1767 = vpop.f32.mrb[0].mxu0
        %v1768 = vpop.f32.mrb[0].mxu0
        %v1769 = vpop.f32.mrb[0].mxu0
        %1770 = vdwg.mxu0
        %v1771 = vsel %vm1586, %v1628, -inf
        %1772 = vmax.xlane.f32.xlu0 %v1771
        %v1773 = vpop.xlane.xlu0 %1772
        %v1774 = vsel %vm1586, %v1674, -inf
        %1775 = vmax.xlane.f32.xlu0 %v1774
        %v1776 = vpop.xlane.xlu0 %1775
        %v1777 = vsel %vm1586, %v1720, -inf
        %1778 = vmax.xlane.f32.xlu0 %v1777
        %v1779 = vpop.xlane.xlu0 %1778
        %v1780 = vsel %vm1586, %v1766, -inf
        %1781 = vmax.xlane.f32.xlu0 %v1780
        %v1782 = vpop.xlane.xlu0 %1781
        %v1783 = vsub.f32 %v1628, %v1773
        %v1784 = vsub.f32 %v1674, %v1776
        %v1785 = vsub.f32 %v1720, %v1779
        %v1786 = vsub.f32 %v1766, %v1782
        %v1787 = vmul.f32 %v1783, 1.442695
        %v1788 = vpow.pop %v1787
        %v1789 = vmul.f32 %v1784, 1.442695
        %v1790 = vpow.pop %v1789
        %v1791 = vmul.f32 %v1785, 1.442695
        %v1792 = vpow.pop %v1791
        %v1793 = vmul.f32 %v1786, 1.442695
        %v1794 = vpow.pop %v1793
        %v1795 = vsel %vm1586, %v1788, 0.0
        %1796 = vadd.xlane.f32.xlu0 %v1795
        %v1797 = vpop.xlane.xlu0 %1796
        %v1798 = vsel %vm1586, %v1790, 0.0
        %1799 = vadd.xlane.f32.xlu0 %v1798
        %v1800 = vpop.xlane.xlu0 %1799
        %v1801 = vsel %vm1586, %v1792, 0.0
        %1802 = vadd.xlane.f32.xlu0 %v1801
        %v1803 = vpop.xlane.xlu0 %1802
        %v1804 = vsel %vm1586, %v1794, 0.0
        %1805 = vadd.xlane.f32.xlu0 %v1804
        %v1806 = vpop.xlane.xlu0 %1805
        %v1807 = vrcp.pop %v1797
        %v1808 = vrcp.pop %v1800
        %v1809 = vrcp.pop %v1803
        %v1810 = vrcp.pop %v1806
        %v1811 = vmul.f32 %v1788, %v1807
        %v1812 = vmul.f32 %v1790, %v1808
        %v1813 = vmul.f32 %v1792, %v1809
        %v1814 = vmul.f32 %v1794, %v1810
        %v1815 = vpack.c.bf16 %v1811, %v1811
        %v1816 = vpack.c.bf16 %v1812, %v1812
        %v1817 = vpack.c.bf16 %v1813, %v1813
        %v1818 = vpack.c.bf16 %v1814, %v1814
        %v1820 = vsel %vm1586, %v1815, 0
        %vm1822 = vcmask 1043456
        %v1824 = vsel %vm1822, %v1582, 0
        %1826 = vmatprep.subr.bf16.mxu0 0
        %1827 = vmatpush1.bf16.msra.mxu0 %v1824
        %1828 = vmatprep.subr.bf16.mxu0 0
        %1829 = vmatpush1.bf16.msra.mxu0 0
        %1830 = vmatprep.subr.bf16.mxu0 0
        %1831 = vmatpush1.bf16.msra.mxu0 0
        %1832 = vmatprep.subr.bf16.mxu0 0
        %1833 = vmatpush1.bf16.msra.mxu0 0
        %1834 = vmatprep.subr.bf16.mxu0 0
        %1835 = vmatpush1.bf16.msra.mxu0 0
        %1836 = vmatprep.subr.bf16.mxu0 0
        %1837 = vmatpush1.bf16.msra.mxu0 0
        %1838 = vmatprep.subr.bf16.mxu0 0
        %1839 = vmatpush1.bf16.msra.mxu0 0
        %1840 = vmatprep.subr.bf16.mxu0 0
        %1841 = vmatpush1.bf16.msra.mxu0 0
        %1842 = vmatprep.subr.bf16.mxu0 0
        %1843 = vmatpush1.bf16.msra.mxu0 0
        %1844 = vmatprep.subr.bf16.mxu0 0
        %1845 = vmatpush1.bf16.msra.mxu0 0
        %1846 = vmatprep.subr.bf16.mxu0 0
        %1847 = vmatpush1.bf16.msra.mxu0 0
        %1848 = vmatprep.subr.bf16.mxu0 0
        %1849 = vmatpush1.bf16.msra.mxu0 0
        %1850 = vmatprep.subr.bf16.mxu0 0
        %1851 = vmatpush1.bf16.msra.mxu0 0
        %1852 = vmatprep.subr.bf16.mxu0 0
        %1853 = vmatpush1.bf16.msra.mxu0 0
        %1854 = vmatprep.subr.bf16.mxu0 0
        %1855 = vmatpush1.bf16.msra.mxu0 0
        %1856 = vmatprep.subr.bf16.mxu0 0
        %1857 = vmatpush1.bf16.msra.mxu0 0
        %1858 = vmatprep.mubr.bf16.mxu0 0
        %1859 = vmatmul.mubr.bf16.gmra.mrb[0].mxu0 %v1820
        %v1860 = vpop.f32.mrb[0].mxu0
        %v1861 = vadd.f32 0.0, %v1860
        %v1862 = vpop.f32.mrb[0].mxu0
        %v1863 = vpop.f32.mrb[0].mxu0
        %v1864 = vpop.f32.mrb[0].mxu0
        %1865 = vdwg.mxu0
        %v1867 = vsel %vm1586, %v1816, 0
        %v1870 = vsel %vm1822, %v1583, 0
        %1872 = vmatprep.subr.bf16.mxu0 0
        %1873 = vmatpush1.bf16.msra.mxu0 %v1870
        %1874 = vmatprep.subr.bf16.mxu0 0
        %1875 = vmatpush1.bf16.msra.mxu0 0
        %1876 = vmatprep.subr.bf16.mxu0 0
        %1877 = vmatpush1.bf16.msra.mxu0 0
        %1878 = vmatprep.subr.bf16.mxu0 0
        %1879 = vmatpush1.bf16.msra.mxu0 0
        %1880 = vmatprep.subr.bf16.mxu0 0
        %1881 = vmatpush1.bf16.msra.mxu0 0
        %1882 = vmatprep.subr.bf16.mxu0 0
        %1883 = vmatpush1.bf16.msra.mxu0 0
        %1884 = vmatprep.subr.bf16.mxu0 0
        %1885 = vmatpush1.bf16.msra.mxu0 0
        %1886 = vmatprep.subr.bf16.mxu0 0
        %1887 = vmatpush1.bf16.msra.mxu0 0
        %1888 = vmatprep.subr.bf16.mxu0 0
        %1889 = vmatpush1.bf16.msra.mxu0 0
        %1890 = vmatprep.subr.bf16.mxu0 0
        %1891 = vmatpush1.bf16.msra.mxu0 0
        %1892 = vmatprep.subr.bf16.mxu0 0
        %1893 = vmatpush1.bf16.msra.mxu0 0
        %1894 = vmatprep.subr.bf16.mxu0 0
        %1895 = vmatpush1.bf16.msra.mxu0 0
        %1896 = vmatprep.subr.bf16.mxu0 0
        %1897 = vmatpush1.bf16.msra.mxu0 0
        %1898 = vmatprep.subr.bf16.mxu0 0
        %1899 = vmatpush1.bf16.msra.mxu0 0
        %1900 = vmatprep.subr.bf16.mxu0 0
        %1901 = vmatpush1.bf16.msra.mxu0 0
        %1902 = vmatprep.subr.bf16.mxu0 0
        %1903 = vmatpush1.bf16.msra.mxu0 0
        %1904 = vmatprep.mubr.bf16.mxu0 0
        %1905 = vmatmul.mubr.bf16.gmra.mrb[0].mxu0 %v1867
        %v1906 = vpop.f32.mrb[0].mxu0
        %v1907 = vadd.f32 0.0, %v1906
        %v1908 = vpop.f32.mrb[0].mxu0
        %v1909 = vpop.f32.mrb[0].mxu0
        %v1910 = vpop.f32.mrb[0].mxu0
        %1911 = vdwg.mxu0
        %v1913 = vsel %vm1586, %v1817, 0
        %v1916 = vsel %vm1822, %v1584, 0
        %1918 = vmatprep.subr.bf16.mxu0 0
        %1919 = vmatpush1.bf16.msra.mxu0 %v1916
        %1920 = vmatprep.subr.bf16.mxu0 0
        %1921 = vmatpush1.bf16.msra.mxu0 0
        %1922 = vmatprep.subr.bf16.mxu0 0
        %1923 = vmatpush1.bf16.msra.mxu0 0
        %1924 = vmatprep.subr.bf16.mxu0 0
        %1925 = vmatpush1.bf16.msra.mxu0 0
        %1926 = vmatprep.subr.bf16.mxu0 0
        %1927 = vmatpush1.bf16.msra.mxu0 0
        %1928 = vmatprep.subr.bf16.mxu0 0
        %1929 = vmatpush1.bf16.msra.mxu0 0
        %1930 = vmatprep.subr.bf16.mxu0 0
        %1931 = vmatpush1.bf16.msra.mxu0 0
        %1932 = vmatprep.subr.bf16.mxu0 0
        %1933 = vmatpush1.bf16.msra.mxu0 0
        %1934 = vmatprep.subr.bf16.mxu0 0
        %1935 = vmatpush1.bf16.msra.mxu0 0
        %1936 = vmatprep.subr.bf16.mxu0 0
        %1937 = vmatpush1.bf16.msra.mxu0 0
        %1938 = vmatprep.subr.bf16.mxu0 0
        %1939 = vmatpush1.bf16.msra.mxu0 0
        %1940 = vmatprep.subr.bf16.mxu0 0
        %1941 = vmatpush1.bf16.msra.mxu0 0
        %1942 = vmatprep.subr.bf16.mxu0 0
        %1943 = vmatpush1.bf16.msra.mxu0 0
        %1944 = vmatprep.subr.bf16.mxu0 0
        %1945 = vmatpush1.bf16.msra.mxu0 0
        %1946 = vmatprep.subr.bf16.mxu0 0
        %1947 = vmatpush1.bf16.msra.mxu0 0
        %1948 = vmatprep.subr.bf16.mxu0 0
        %1949 = vmatpush1.bf16.msra.mxu0 0
        %1950 = vmatprep.mubr.bf16.mxu0 0
        %1951 = vmatmul.mubr.bf16.gmra.mrb[0].mxu0 %v1913
        %v1952 = vpop.f32.mrb[0].mxu0
        %v1953 = vadd.f32 0.0, %v1952
        %v1954 = vpop.f32.mrb[0].mxu0
        %v1955 = vpop.f32.mrb[0].mxu0
        %v1956 = vpop.f32.mrb[0].mxu0
        %1957 = vdwg.mxu0
        %v1959 = vsel %vm1586, %v1818, 0
        %v1962 = vsel %vm1822, %v1585, 0
        %1964 = vmatprep.subr.bf16.mxu0 0
        %1965 = vmatpush1.bf16.msra.mxu0 %v1962
        %1966 = vmatprep.subr.bf16.mxu0 0
        %1967 = vmatpush1.bf16.msra.mxu0 0
        %1968 = vmatprep.subr.bf16.mxu0 0
        %1969 = vmatpush1.bf16.msra.mxu0 0
        %1970 = vmatprep.subr.bf16.mxu0 0
        %1971 = vmatpush1.bf16.msra.mxu0 0
        %1972 = vmatprep.subr.bf16.mxu0 0
        %1973 = vmatpush1.bf16.msra.mxu0 0
        %1974 = vmatprep.subr.bf16.mxu0 0
        %1975 = vmatpush1.bf16.msra.mxu0 0
        %1976 = vmatprep.subr.bf16.mxu0 0
        %1977 = vmatpush1.bf16.msra.mxu0 0
        %1978 = vmatprep.subr.bf16.mxu0 0
        %1979 = vmatpush1.bf16.msra.mxu0 0
        %1980 = vmatprep.subr.bf16.mxu0 0
        %1981 = vmatpush1.bf16.msra.mxu0 0
        %1982 = vmatprep.subr.bf16.mxu0 0
        %1983 = vmatpush1.bf16.msra.mxu0 0
        %1984 = vmatprep.subr.bf16.mxu0 0
        %1985 = vmatpush1.bf16.msra.mxu0 0
        %1986 = vmatprep.subr.bf16.mxu0 0
        %1987 = vmatpush1.bf16.msra.mxu0 0
        %1988 = vmatprep.subr.bf16.mxu0 0
        %1989 = vmatpush1.bf16.msra.mxu0 0
        %1990 = vmatprep.subr.bf16.mxu0 0
        %1991 = vmatpush1.bf16.msra.mxu0 0
        %1992 = vmatprep.subr.bf16.mxu0 0
        %1993 = vmatpush1.bf16.msra.mxu0 0
        %1994 = vmatprep.subr.bf16.mxu0 0
        %1995 = vmatpush1.bf16.msra.mxu0 0
        %1996 = vmatprep.mubr.bf16.mxu0 0
        %1997 = vmatmul.mubr.bf16.gmra.mrb[0].mxu0 %v1959
        %v1998 = vpop.f32.mrb[0].mxu0
        %v1999 = vadd.f32 0.0, %v1998
        %v2000 = vpop.f32.mrb[0].mxu0
        %v2001 = vpop.f32.mrb[0].mxu0
        %v2002 = vpop.f32.mrb[0].mxu0
        %2003 = vdwg.mxu0
        %v2004 = vcombine.low %v1861, %v1953
        %v2005 = vcombine.high %v1861, %v1953
        %v2007 = vunpack.c.l.s4 1983009808
        %v2008 = vunpack.c.0.s8 %v2007
        %v2009 = vlaneseq
        %v2010 = vshrl.u32 %v2009, 7
        %v2011 = vsub.s32 %v2008, %v2010
        %v2012 = vrot.slane %v2004, %v2011
        %v2014 = vunpack.c.l.s4 1983009808
        %v2015 = vunpack.c.0.s8 %v2014
        %v2016 = vlaneseq
        %v2017 = vshrl.u32 %v2016, 7
        %v2018 = vsub.s32 %v2015, %v2017
        %v2019 = vrot.slane %v2005, %v2018
        %v2020 = vcombine.low %v1907, %v1999
        %v2021 = vcombine.high %v1907, %v1999
        %v2023 = vunpack.c.l.s4 1983009808
        %v2024 = vunpack.c.0.s8 %v2023
        %v2025 = vlaneseq
        %v2026 = vshrl.u32 %v2025, 7
        %v2027 = vsub.s32 %v2024, %v2026
        %v2028 = vrot.slane %v2020, %v2027
        %v2030 = vunpack.c.l.s4 1983009808
        %v2031 = vunpack.c.0.s8 %v2030
        %v2032 = vlaneseq
        %v2033 = vshrl.u32 %v2032, 7
        %v2034 = vsub.s32 %v2031, %v2033
        %v2035 = vrot.slane %v2021, %v2034
        %v2036 = vcombine.low %v2012, %v2028
        %v2037 = vcombine.high %v2012, %v2028
        %v2039 = vunpack.c.l.s4 1934713408
        %v2040 = vunpack.c.0.s8 %v2039
        %v2041 = vlaneseq
        %v2042 = vshrl.u32 %v2041, 7
        %v2043 = vsub.s32 %v2040, %v2042
        %v2044 = vrot.slane %v2036, %v2043
        %v2046 = vunpack.c.l.s4 1934713408
        %v2047 = vunpack.c.0.s8 %v2046
        %v2048 = vlaneseq
        %v2049 = vshrl.u32 %v2048, 7
        %v2050 = vsub.s32 %v2047, %v2049
        %v2051 = vrot.slane %v2037, %v2050
        %v2052 = vcombine.low %v2019, %v2035
        %v2053 = vcombine.high %v2019, %v2035
        %v2055 = vunpack.c.l.s4 1934713408
        %v2056 = vunpack.c.0.s8 %v2055
        %v2057 = vlaneseq
        %v2058 = vshrl.u32 %v2057, 7
        %v2059 = vsub.s32 %v2056, %v2058
        %v2060 = vrot.slane %v2052, %v2059
        %v2062 = vunpack.c.l.s4 1934713408
        %v2063 = vunpack.c.0.s8 %v2062
        %v2064 = vlaneseq
        %v2065 = vshrl.u32 %v2064, 7
        %v2066 = vsub.s32 %v2063, %v2065
        %v2067 = vrot.slane %v2053, %v2066
        %v2068 = vcombine.high %v2044, 0.0
        %v2069 = vcombine.high %v2051, 0.0
        %v2070 = vcombine.high %v2060, 0.0
        %v2071 = vcombine.high %v2067, 0.0
        %v2072 = vcombine.low %v2044, %v2051
        %v2074 = vunpack.c.l.s4 1983009808
        %v2075 = vunpack.c.0.s8 %v2074
        %v2076 = vlaneseq
        %v2077 = vshrl.u32 %v2076, 7
        %v2078 = vsub.s32 %v2075, %v2077
        %v2079 = vrot.slane %v2072, %v2078
        %v2080 = vcombine.low %v2068, %v2069
        %v2082 = vunpack.c.l.s4 1983009808
        %v2083 = vunpack.c.0.s8 %v2082
        %v2084 = vlaneseq
        %v2085 = vshrl.u32 %v2084, 7
        %v2086 = vsub.s32 %v2083, %v2085
        %v2087 = vrot.slane %v2080, %v2086
        %v2088 = vcombine.low %v2060, %v2067
        %v2090 = vunpack.c.l.s4 1983009808
        %v2091 = vunpack.c.0.s8 %v2090
        %v2092 = vlaneseq
        %v2093 = vshrl.u32 %v2092, 7
        %v2094 = vsub.s32 %v2091, %v2093
        %v2095 = vrot.slane %v2088, %v2094
        %v2096 = vcombine.low %v2070, %v2071
        %v2098 = vunpack.c.l.s4 1983009808
        %v2099 = vunpack.c.0.s8 %v2098
        %v2100 = vlaneseq
        %v2101 = vshrl.u32 %v2100, 7
        %v2102 = vsub.s32 %v2099, %v2101
        %v2103 = vrot.slane %v2096, %v2102
        %v2104 = vcombine.low %v2079, %v2087
        %v2105 = vcombine.high %v2079, %v2087
        %v2107 = vunpack.c.l.s4 1934713408
        %v2108 = vunpack.c.0.s8 %v2107
        %v2109 = vlaneseq
        %v2110 = vshrl.u32 %v2109, 7
        %v2111 = vsub.s32 %v2108, %v2110
        %v2112 = vrot.slane %v2104, %v2111
        %v2114 = vunpack.c.l.s4 1934713408
        %v2115 = vunpack.c.0.s8 %v2114
        %v2116 = vlaneseq
        %v2117 = vshrl.u32 %v2116, 7
        %v2118 = vsub.s32 %v2115, %v2117
        %v2119 = vrot.slane %v2105, %v2118
        %v2120 = vcombine.low %v2095, %v2103
        %v2121 = vcombine.high %v2095, %v2103
        %v2123 = vunpack.c.l.s4 1934713408
        %v2124 = vunpack.c.0.s8 %v2123
        %v2125 = vlaneseq
        %v2126 = vshrl.u32 %v2125, 7
        %v2127 = vsub.s32 %v2124, %v2126
        %v2128 = vrot.slane %v2120, %v2127
        %v2130 = vunpack.c.l.s4 1934713408
        %v2131 = vunpack.c.0.s8 %v2130
        %v2132 = vlaneseq
        %v2133 = vshrl.u32 %v2132, 7
        %v2134 = vsub.s32 %v2131, %v2133
        %v2135 = vrot.slane %v2121, %v2134
        %v2136 = vcombine.low %v2112, %v2128
        %v2137 = vcombine.high %v2112, %v2128
        %v2138 = vcombine.low %v2119, %v2135
        %v2139 = vcombine.high %v2119, %v2135
        %2141 = vrot.lane.b32.xlu0 %v2137, 8
        %v2142 = vpop.permute.xlu0 %2141
        %2145 = vrot.lane.b32.xlu0 %v2138, 16
        %v2146 = vpop.permute.xlu0 %2145
        %2149 = vrot.lane.b32.xlu0 %v2139, 24
        %v2150 = vpop.permute.xlu0 %2149
        %v2152 = vsel %vm1586, %v2136, %v2142
        %vm2153 = vcmask 130048
        %v2154 = vsel %vm2153, %v2152, %v2146
        %vm2155 = vcmask 195584
        %v2156 = vsel %vm2155, %v2154, %v2150
        %v2157 = vpack.c.bf16 %v2156, %v2156
        %v2158 = vld [vmem:[%s873] sm:$0xf]
        %v2159 = vld [vmem:[%s873 + $0x4] sm:$0xf]
        %v2160 = vld [vmem:[%s873 + $0x8] sm:$0xf]
        %v2161 = vld [vmem:[%s873 + $0xc] sm:$0xf]
        %v2162 = vld [vmem:[%s876] sm:$0x1]
        %v2164 = vlaneseq
        %v2165 = vshrl.u32 %v2164, 7
        %v2166 = vsub.s32 0, %v2165
        %v2167 = vrot.slane %v2162, %v2166
        %v2173 = vunpack.c.l.b16 %v2158
        %v2174 = vunpack.c.l.b16 %v2159
        %v2175 = vunpack.c.l.b16 %v2160
        %v2176 = vunpack.c.l.b16 %v2161
        %v2177 = vpack.c.b16 %v2174, %v2173
        %v2178 = vpack.c.b16 %v2176, %v2175
        %v2182 = vsel %vm914, %v2157, 0
        %2184 = vmatprep.subr.bf16.mxu0 0
        %2185 = vmatpush1.bf16.msra.mxu0 %v2177
        %2186 = vmatprep.subr.bf16.mxu0 0
        %2187 = vmatpush1.bf16.msra.mxu0 %v2178
        %2188 = vmatprep.subr.bf16.mxu0 0
        %2189 = vmatpush1.bf16.msra.mxu0 0
        %2190 = vmatprep.subr.bf16.mxu0 0
        %2191 = vmatpush1.bf16.msra.mxu0 0
        %2192 = vmatprep.subr.bf16.mxu0 0
        %2193 = vmatpush1.bf16.msra.mxu0 0
        %2194 = vmatprep.subr.bf16.mxu0 0
        %2195 = vmatpush1.bf16.msra.mxu0 0
        %2196 = vmatprep.subr.bf16.mxu0 0
        %2197 = vmatpush1.bf16.msra.mxu0 0
        %2198 = vmatprep.subr.bf16.mxu0 0
        %2199 = vmatpush1.bf16.msra.mxu0 0
        %2200 = vmatprep.subr.bf16.mxu0 0
        %2201 = vmatpush1.bf16.msra.mxu0 0
        %2202 = vmatprep.subr.bf16.mxu0 0
        %2203 = vmatpush1.bf16.msra.mxu0 0
        %2204 = vmatprep.subr.bf16.mxu0 0
        %2205 = vmatpush1.bf16.msra.mxu0 0
        %2206 = vmatprep.subr.bf16.mxu0 0
        %2207 = vmatpush1.bf16.msra.mxu0 0
        %2208 = vmatprep.subr.bf16.mxu0 0
        %2209 = vmatpush1.bf16.msra.mxu0 0
        %2210 = vmatprep.subr.bf16.mxu0 0
        %2211 = vmatpush1.bf16.msra.mxu0 0
        %2212 = vmatprep.subr.bf16.mxu0 0
        %2213 = vmatpush1.bf16.msra.mxu0 0
        %2214 = vmatprep.subr.bf16.mxu0 0
        %2215 = vmatpush1.bf16.msra.mxu0 0
        %2216 = vmatprep.mubr.bf16.mxu0 0
        %2217 = vmatmul.mubr.bf16.gmra.mrb[0].mxu0 %v2182
        %v2218 = vpop.f32.mrb[0].mxu0
        %v2219 = vadd.f32 %v2167, %v2218
        %v2220 = vpop.f32.mrb[0].mxu0
        %v2221 = vpop.f32.mrb[0].mxu0
        %v2222 = vpop.f32.mrb[0].mxu0
        %2223 = vdwg.mxu0
        %v2224 = vadd.f32 %v911, %v2219
        %v2225 = vld [vmem:[%s879] sm:$0x1]
        %v2226 = vld [vmem:[%s882] sm:$0x1]
        %v2227 = vsel %vm914, %v2224, 0.0
        %2228 = vadd.xlane.f32.xlu0 %v2227
        %v2229 = vpop.xlane.xlu0 %2228
        %v2230 = vmul.f32 %v2229, %v918
        %v2231 = vsub.f32 %v2224, %v2230
        %v2232 = vmul.f32 %v2231, %v2231
        %v2233 = vsel %vm914, %v2232, 0.0
        %2234 = vadd.xlane.f32.xlu0 %v2233
        %v2235 = vpop.xlane.xlu0 %2234
        %v2236 = vmul.f32 %v2235, %v918
        %v2237 = vadd.f32 %v2236, 1e-05
        %v2238 = vrsqrt.pop %v2237
        %v2239 = vmul.f32 %v2231, %v2238
        %v2241 = vlaneseq
        %v2242 = vshrl.u32 %v2241, 7
        %v2243 = vsub.s32 0, %v2242
        %v2244 = vrot.slane %v2225, %v2243
        %v2246 = vmul.f32 %v2239, %v2244
        %v2248 = vlaneseq
        %v2249 = vshrl.u32 %v2248, 7
        %v2250 = vsub.s32 0, %v2249
        %v2251 = vrot.slane %v2226, %v2250
        %v2253 = vadd.f32 %v2246, %v2251
        %v2254 = vpack.c.bf16 %v2253, %v2253
        %v2255 = vld [vmem:[%s887] sm:$0xff]
        %v2256 = vld [vmem:[%s887 + $0x8] sm:$0xff]
        %v2257 = vld [vmem:[%s887 + $0x10] sm:$0xff]
        %v2258 = vld [vmem:[%s887 + $0x18] sm:$0xff]
        %v2259 = vld [vmem:[%s891] sm:$0x3]
        %v2261 = vlaneseq
        %v2262 = vshrl.u32 %v2261, 7
        %v2263 = vsub.s32 0, %v2262
        %v2264 = vrot.slane %v2259, %v2263
        %v2265 = vlaneseq
        %v2266 = vshrl.u32 %v2265, 7
        %v2267 = vsub.s32 1, %v2266
        %v2268 = vrot.slane %v2259, %v2267
        %v2275 = vunpack.c.l.b16 %v2255
        %v2276 = vunpack.c.h.b16 %v2255
        %v2277 = vunpack.c.l.b16 %v2256
        %v2278 = vunpack.c.h.b16 %v2256
        %v2279 = vunpack.c.l.b16 %v2257
        %v2280 = vunpack.c.h.b16 %v2257
        %v2281 = vunpack.c.l.b16 %v2258
        %v2282 = vunpack.c.h.b16 %v2258
        %v2283 = vpack.c.b16 %v2277, %v2275
        %v2284 = vpack.c.b16 %v2278, %v2276
        %v2285 = vpack.c.b16 %v2281, %v2279
        %v2286 = vpack.c.b16 %v2282, %v2280
        %v2292 = vsel %vm914, %v2254, 0
        %2294 = vmatprep.subr.bf16.mxu0 %v2284
        %2295 = vmatpush1.bf16.msra.mxu0 %v2283
        %2296 = vmatprep.subr.bf16.mxu0 %v2286
        %2297 = vmatpush1.bf16.msra.mxu0 %v2285
        %2298 = vmatprep.subr.bf16.mxu0 0
        %2299 = vmatpush1.bf16.msra.mxu0 0
        %2300 = vmatprep.subr.bf16.mxu0 0
        %2301 = vmatpush1.bf16.msra.mxu0 0
        %2302 = vmatprep.subr.bf16.mxu0 0
        %2303 = vmatpush1.bf16.msra.mxu0 0
        %2304 = vmatprep.subr.bf16.mxu0 0
        %2305 = vmatpush1.bf16.msra.mxu0 0
        %2306 = vmatprep.subr.bf16.mxu0 0
        %2307 = vmatpush1.bf16.msra.mxu0 0
        %2308 = vmatprep.subr.bf16.mxu0 0
        %2309 = vmatpush1.bf16.msra.mxu0 0
        %2310 = vmatprep.subr.bf16.mxu0 0
        %2311 = vmatpush1.bf16.msra.mxu0 0
        %2312 = vmatprep.subr.bf16.mxu0 0
        %2313 = vmatpush1.bf16.msra.mxu0 0
        %2314 = vmatprep.subr.bf16.mxu0 0
        %2315 = vmatpush1.bf16.msra.mxu0 0
        %2316 = vmatprep.subr.bf16.mxu0 0
        %2317 = vmatpush1.bf16.msra.mxu0 0
        %2318 = vmatprep.subr.bf16.mxu0 0
        %2319 = vmatpush1.bf16.msra.mxu0 0
        %2320 = vmatprep.subr.bf16.mxu0 0
        %2321 = vmatpush1.bf16.msra.mxu0 0
        %2322 = vmatprep.subr.bf16.mxu0 0
        %2323 = vmatpush1.bf16.msra.mxu0 0
        %2324 = vmatprep.subr.bf16.mxu0 0
        %2325 = vmatpush1.bf16.msra.mxu0 0
        %2326 = vmatprep.mubr.bf16.mxu0 0
        %2327 = vmatmul.mubr.bf16.gmra.mrb[0].mxu0 %v2292
        %v2328 = vpop.f32.mrb[0].mxu0
        %v2329 = vadd.f32 %v2264, %v2328
        %v2330 = vpop.f32.mrb[0].mxu0
        %v2331 = vadd.f32 %v2268, %v2330
        %v2332 = vpop.f32.mrb[0].mxu0
        %v2333 = vpop.f32.mrb[0].mxu0
        %2334 = vdwg.mxu0
        %v2335 = vmax.f32 %v2329, 0.0
        %v2336 = vmax.f32 %v2331, 0.0
        %v2337 = vpack.c.bf16 %v2335, %v2335
        %v2338 = vpack.c.bf16 %v2336, %v2336
        %v2339 = vld [vmem:[%s896] sm:$0xf]
        %v2340 = vld [vmem:[%s896 + $0x4] sm:$0xf]
        %v2341 = vld [vmem:[%s896 + $0x8] sm:$0xf]
        %v2342 = vld [vmem:[%s896 + $0xc] sm:$0xf]
        %v2343 = vld [vmem:[%s896 + $0x10] sm:$0xf]
        %v2344 = vld [vmem:[%s896 + $0x14] sm:$0xf]
        %v2345 = vld [vmem:[%s896 + $0x18] sm:$0xf]
        %v2346 = vld [vmem:[%s896 + $0x1c] sm:$0xf]
        %v2347 = vld [vmem:[%s896 + $0x20] sm:$0xf]
        %v2348 = vld [vmem:[%s896 + $0x24] sm:$0xf]
        %v2349 = vld [vmem:[%s896 + $0x28] sm:$0xf]
        %v2350 = vld [vmem:[%s896 + $0x2c] sm:$0xf]
        %v2351 = vld [vmem:[%s896 + $0x30] sm:$0xf]
        %v2352 = vld [vmem:[%s896 + $0x34] sm:$0xf]
        %v2353 = vld [vmem:[%s896 + $0x38] sm:$0xf]
        %v2354 = vld [vmem:[%s896 + $0x3c] sm:$0xf]
        %v2355 = vld [vmem:[%s896 + $0x40] sm:$0xf]
        %v2356 = vld [vmem:[%s896 + $0x44] sm:$0xf]
        %v2357 = vld [vmem:[%s896 + $0x48] sm:$0xf]
        %v2358 = vld [vmem:[%s896 + $0x4c] sm:$0xf]
        %v2359 = vld [vmem:[%s896 + $0x50] sm:$0xf]
        %v2360 = vld [vmem:[%s896 + $0x54] sm:$0xf]
        %v2361 = vld [vmem:[%s896 + $0x58] sm:$0xf]
        %v2362 = vld [vmem:[%s896 + $0x5c] sm:$0xf]
        %v2363 = vld [vmem:[%s896 + $0x60] sm:$0xf]
        %v2364 = vld [vmem:[%s896 + $0x64] sm:$0xf]
        %v2365 = vld [vmem:[%s896 + $0x68] sm:$0xf]
        %v2366 = vld [vmem:[%s896 + $0x6c] sm:$0xf]
        %v2367 = vld [vmem:[%s896 + $0x70] sm:$0xf]
        %v2368 = vld [vmem:[%s896 + $0x74] sm:$0xf]
        %v2369 = vld [vmem:[%s896 + $0x78] sm:$0xf]
        %v2370 = vld [vmem:[%s896 + $0x7c] sm:$0xf]
        %v2371 = vld [vmem:[%s899] sm:$0x1]
        %v2373 = vlaneseq
        %v2374 = vshrl.u32 %v2373, 7
        %v2375 = vsub.s32 0, %v2374
        %v2376 = vrot.slane %v2371, %v2375
        %v2410 = vunpack.c.l.b16 %v2339
        %v2411 = vunpack.c.l.b16 %v2340
        %v2412 = vunpack.c.l.b16 %v2341
        %v2413 = vunpack.c.l.b16 %v2342
        %v2414 = vunpack.c.l.b16 %v2343
        %v2415 = vunpack.c.l.b16 %v2344
        %v2416 = vunpack.c.l.b16 %v2345
        %v2417 = vunpack.c.l.b16 %v2346
        %v2418 = vunpack.c.l.b16 %v2347
        %v2419 = vunpack.c.l.b16 %v2348
        %v2420 = vunpack.c.l.b16 %v2349
        %v2421 = vunpack.c.l.b16 %v2350
        %v2422 = vunpack.c.l.b16 %v2351
        %v2423 = vunpack.c.l.b16 %v2352
        %v2424 = vunpack.c.l.b16 %v2353
        %v2425 = vunpack.c.l.b16 %v2354
        %v2426 = vunpack.c.l.b16 %v2355
        %v2427 = vunpack.c.l.b16 %v2356
        %v2428 = vunpack.c.l.b16 %v2357
        %v2429 = vunpack.c.l.b16 %v2358
        %v2430 = vunpack.c.l.b16 %v2359
        %v2431 = vunpack.c.l.b16 %v2360
        %v2432 = vunpack.c.l.b16 %v2361
        %v2433 = vunpack.c.l.b16 %v2362
        %v2434 = vunpack.c.l.b16 %v2363
        %v2435 = vunpack.c.l.b16 %v2364
        %v2436 = vunpack.c.l.b16 %v2365
        %v2437 = vunpack.c.l.b16 %v2366
        %v2438 = vunpack.c.l.b16 %v2367
        %v2439 = vunpack.c.l.b16 %v2368
        %v2440 = vunpack.c.l.b16 %v2369
        %v2441 = vunpack.c.l.b16 %v2370
        %v2442 = vpack.c.b16 %v2411, %v2410
        %v2443 = vpack.c.b16 %v2413, %v2412
        %v2444 = vpack.c.b16 %v2415, %v2414
        %v2445 = vpack.c.b16 %v2417, %v2416
        %v2446 = vpack.c.b16 %v2419, %v2418
        %v2447 = vpack.c.b16 %v2421, %v2420
        %v2448 = vpack.c.b16 %v2423, %v2422
        %v2449 = vpack.c.b16 %v2425, %v2424
        %v2450 = vpack.c.b16 %v2427, %v2426
        %v2451 = vpack.c.b16 %v2429, %v2428
        %v2452 = vpack.c.b16 %v2431, %v2430
        %v2453 = vpack.c.b16 %v2433, %v2432
        %v2454 = vpack.c.b16 %v2435, %v2434
        %v2455 = vpack.c.b16 %v2437, %v2436
        %v2456 = vpack.c.b16 %v2439, %v2438
        %v2457 = vpack.c.b16 %v2441, %v2440
        %2474 = vmatprep.subr.bf16.mxu0 0
        %2475 = vmatpush1.bf16.msra.mxu0 %v2442
        %2476 = vmatprep.subr.bf16.mxu0 0
        %2477 = vmatpush1.bf16.msra.mxu0 %v2443
        %2478 = vmatprep.subr.bf16.mxu0 0
        %2479 = vmatpush1.bf16.msra.mxu0 %v2444
        %2480 = vmatprep.subr.bf16.mxu0 0
        %2481 = vmatpush1.bf16.msra.mxu0 %v2445
        %2482 = vmatprep.subr.bf16.mxu0 0
        %2483 = vmatpush1.bf16.msra.mxu0 %v2446
        %2484 = vmatprep.subr.bf16.mxu0 0
        %2485 = vmatpush1.bf16.msra.mxu0 %v2447
        %2486 = vmatprep.subr.bf16.mxu0 0
        %2487 = vmatpush1.bf16.msra.mxu0 %v2448
        %2488 = vmatprep.subr.bf16.mxu0 0
        %2489 = vmatpush1.bf16.msra.mxu0 %v2449
        %2490 = vmatprep.subr.bf16.mxu0 0
        %2491 = vmatpush1.bf16.msra.mxu0 %v2450
        %2492 = vmatprep.subr.bf16.mxu0 0
        %2493 = vmatpush1.bf16.msra.mxu0 %v2451
        %2494 = vmatprep.subr.bf16.mxu0 0
        %2495 = vmatpush1.bf16.msra.mxu0 %v2452
        %2496 = vmatprep.subr.bf16.mxu0 0
        %2497 = vmatpush1.bf16.msra.mxu0 %v2453
        %2498 = vmatprep.subr.bf16.mxu0 0
        %2499 = vmatpush1.bf16.msra.mxu0 %v2454
        %2500 = vmatprep.subr.bf16.mxu0 0
        %2501 = vmatpush1.bf16.msra.mxu0 %v2455
        %2502 = vmatprep.subr.bf16.mxu0 0
        %2503 = vmatpush1.bf16.msra.mxu0 %v2456
        %2504 = vmatprep.subr.bf16.mxu0 0
        %2505 = vmatpush1.bf16.msra.mxu0 %v2457
        %2506 = vmatprep.mubr.bf16.mxu0 %v2338
        %2507 = vmatmul.mubr.bf16.gmra.mrb[0].mxu0 %v2337
        %v2508 = vpop.f32.mrb[0].mxu0
        %v2509 = vadd.f32 %v2376, %v2508
        %v2510 = vpop.f32.mrb[0].mxu0
        %v2511 = vpop.f32.mrb[0].mxu0
        %v2512 = vpop.f32.mrb[0].mxu0
        %2513 = vdwg.mxu0
        %v2514 = vadd.f32 %v2224, %v2509
        %2515 = vst.msk [vmem:[#allocation2] sm:$0xff] %vm914, %v2514
        %p2516 = scmp.eq.s32.totalorder %s39, 1
        // Predicated region
        $region105: #{tpu_custom_call.1} parent=99 // pred_check
          %p2517 = pneg %p2516
        $region106: #{tpu_custom_call.1} parent=99 // pred_check_branch
          %2519 = sbr.rel (%p2517) target = $region108
        $region107: #{tpu_custom_call.1} parent=99 // pred_region
          %v2520 = vld [vmem:[%s18] sm:$0x1]
          %v2521 = vld [vmem:[%s19] sm:$0x1]
          %v2522 = vsel %vm914, %v2514, 0.0
          %2523 = vadd.xlane.f32.xlu0 %v2522
          %v2524 = vpop.xlane.xlu0 %2523
          %v2525 = vmul.f32 %v2524, %v918
          %v2526 = vsub.f32 %v2514, %v2525
          %v2527 = vmul.f32 %v2526, %v2526
          %v2528 = vsel %vm914, %v2527, 0.0
          %2529 = vadd.xlane.f32.xlu0 %v2528
          %v2530 = vpop.xlane.xlu0 %2529
          %v2531 = vmul.f32 %v2530, %v918
          %v2532 = vadd.f32 %v2531, 1e-05
          %v2533 = vrsqrt.pop %v2532
          %v2534 = vmul.f32 %v2526, %v2533
          %v2536 = vlaneseq
          %v2537 = vshrl.u32 %v2536, 7
          %v2538 = vsub.s32 0, %v2537
          %v2539 = vrot.slane %v2520, %v2538
          %v2541 = vmul.f32 %v2534, %v2539
          %v2543 = vlaneseq
          %v2544 = vshrl.u32 %v2543, 7
          %v2545 = vsub.s32 0, %v2544
          %v2546 = vrot.slane %v2521, %v2545
          %v2548 = vadd.f32 %v2541, %v2546
          %2549 = vst.msk [vmem:[%s834] sm:$0xff] %vm914, %v2548
        $region108: #{tpu_custom_call.1} parent=99 // pred_fallthru
          _
        %s2550 = sand.u32 %s559, 1
        %s2551 = scalar_lea.sflag [#allocation4], %s2550
        %s2552 = sand.u32 %s559, 1
        %s2553 = smul.addr %s2552, 8
        %s2554 = scalar_lea.vmem [#allocation3], %s2553
        // Predicated region
        $region109: #{tpu_custom_call.1} parent=99 // pred_check
          %p2555 = pneg %p569
        $region110: #{tpu_custom_call.1} parent=99 // pred_check_branch
          %2557 = sbr.rel (%p2555) target = $region112
        $region111: #{tpu_custom_call.1} parent=99 // pred_region
          %s2559 = ssub.s32 128, 128
          %2560 = vsyncadd %s2551, %s2559
          %s2561 = smul.addr %s38, 128
          %s2562 = scalar_lea.hbm %s20, %s2561
          %s2564 = sshll.u32 %s2554, 4
          %s2565 = int_to_ptr.vmem [resolvable:$true] %s2564
          %2567 = dma.vmem_to_hbm [thread:$0]  %s2565, 128, %s2562, %s2551
        $region112: #{tpu_custom_call.1} parent=99 // pred_fallthru
          _
      $region100: #{tpu_custom_call.1} parent=5 // pred_fallthru
        _
      %p2568 = scmp.le.s32.totalorder 2, %s29
      // Predicated region
      $region113: #{tpu_custom_call.1} parent=5 // pred_check
        %p2569 = pneg %p2568
      $region114: #{tpu_custom_call.1} parent=5 // pred_check_branch
        %2571 = sbr.rel (%p2569) target = $region116
      $region115: #{tpu_custom_call.1} parent=5 // pred_region
        %s2572 = ssub.s32 %s29, 2
        // Predicated region
        $region117: #{tpu_custom_call.1} parent=115 // pred_check
          %p2573 = pneg %p575
        $region118: #{tpu_custom_call.1} parent=115 // pred_check_branch
          %2575 = sbr.rel (%p2573) target = $region120
        $region119: #{tpu_custom_call.1} parent=115 // pred_region
          %s2576 = sand.u32 %s560, 1
          %s2577 = scalar_lea.sflag [#allocation4], %s2576
          %s2578 = sand.u32 %s560, 1
          %s2579 = smul.addr %s2578, 8
          %s2580 = scalar_lea.vmem [#allocation3], %s2579
          %2581 = dma.done %s2577, 128
        $region120: #{tpu_custom_call.1} parent=115 // pred_fallthru
          _
      $region116: #{tpu_custom_call.1} parent=5 // pred_fallthru
        _
    $region6: #{tpu_custom_call.1} parent=1 // loop_footer
      %s33 = sadd.s32 1, %s29
    $region7: #{tpu_custom_call.1} parent=1 // loop_footer_branch
      %28 = sbr.rel target = $region3
    $region8: #{tpu_custom_call.1} parent=1 // loop_exit
      _
    %2582 = vsyncpa [#allocation4], 1
    %s2583 = scalar_lea.sflag [#allocation4], 1
    %2584 = vsyncpa %s2583, 1

</llo_original>
